<compile_context>
chip_gen: v6e
topology: v6e:2x2x1
jax: 0.10.0
libtpu: 0.0.40
codegen_flags: <defaults>
</compile_context>

<pallas_src>
import functools

import jax
import jax.numpy as jnp
from jax.experimental import pallas as pl
from jax.experimental.pallas import tpu as pltpu

LANE = 128


def _round_up(x, m):
    return (x + m - 1) // m * m


def _pick_row_tile(n, nhid_pad, c_pad, budget_bytes=40 << 20):
    """Largest row tile TM (divides the lane-padded N) whose double-buffered A tile plus
    resident operands fit a v7x-safe (~40 MiB) VMEM budget. Returns (tm, n_pad, est)."""
    n_pad = _round_up(max(n, LANE), LANE)
    candidates = [t for t in (512, 256, 128, 64, 32, 16, 8) if n_pad % t == 0]
    rhs_resident = 2 * n_pad * max(nhid_pad, c_pad) * 2          # full-resident bf16 RHS (x2 bufs)
    weights = 2 * nhid_pad * 2 * c_pad * 2                       # [W2|V2] (x2 bufs)
    est = None
    for tm in candidates:
        a_tiles = 2 * tm * n_pad * 2                             # double-buffered bf16 A tile
        side = 2 * tm * (nhid_pad + 2 * c_pad) * 4               # row-tiled f32 side ins/outs
        est = a_tiles + rhs_resident + weights + side + (2 << 20)
        if est <= budget_bytes:
            return tm, n_pad, est
    # TODO(synk): for N so large that even TM=8 (or the full-resident (N,128) RHS) blows
    # VMEM, tile the propagation K dimension with an accumulator / go block-sparse.
    return candidates[-1], n_pad, est


# ------------------------------ Pallas kernels ------------------------------ #

def _transform1_kernel(x_ref, wcat_ref, b1_ref, xw_ref, xr_ref, *, nhid_pad):
    """Layer-1 feature transform: one 2*nhid_pad-wide MXU call per row tile."""
    t = jnp.dot(x_ref[...], wcat_ref[...], preferred_element_type=jnp.float32)
    xw_ref[...] = t[:, :nhid_pad].astype(xw_ref.dtype)           # X @ W1   (bf16, prop RHS)
    xr_ref[...] = t[:, nhid_pad:] + b1_ref[...]                  # X @ V1 + b1  (f32 root term)


def _prop1_transform2_kernel(a_ref, xw1_ref, xr1_ref, w2cat_ref, b2_ref,
                             hw2_ref, hr2_ref, *, c_pad):
    """Layer-1 propagation + ReLU, fused with the layer-2 feature transform."""
    h = jnp.dot(a_ref[...], xw1_ref[...], preferred_element_type=jnp.float32)
    h = jnp.maximum(h + xr1_ref[...], 0.0)   # ARMAConv ReLU; outer F.relu is idempotent
    # F.dropout: eval mode -> identity.
    # TODO(synk): training-mode dropout (pltpu.prng_* random mask) intentionally omitted.
    h = h.astype(a_ref.dtype)
    t = jnp.dot(h, w2cat_ref[...], preferred_element_type=jnp.float32)
    hw2_ref[...] = t[:, :c_pad].astype(hw2_ref.dtype)            # h @ W2   (bf16, prop RHS)
    hr2_ref[...] = t[:, c_pad:] + b2_ref[...]                    # h @ V2 + b2  (f32 root term)


def _prop2_softmax_kernel(a_ref, hw2_ref, hr2_ref, cmask_ref, o_ref):
    """Layer-2 propagation + ReLU + masked row softmax (dim=1)."""
    logits = jnp.dot(a_ref[...], hw2_ref[...], preferred_element_type=jnp.float32)
    logits = jnp.maximum(logits + hr2_ref[...], 0.0)
    logits = logits + cmask_ref[...]          # 0 on real classes, -1e30 on padded lanes
    m = jnp.max(logits, axis=1, keepdims=True)
    e = jnp.exp(logits - m)                   # padded lanes underflow to exactly 0
    o_ref[...] = (e / jnp.sum(e, axis=1, keepdims=True)).astype(o_ref.dtype)


# --------------------------------- wrapper ---------------------------------- #

def arma_forward(params, x, a_hat, *, compute_dtype=jnp.bfloat16):
    """Row-tiled Pallas forward. Returns softmax probabilities, shape (N, num_classes)."""
    n, f_in = x.shape
    nhid = params["w1"].shape[1]
    num_classes = params["w2"].shape[1]
    nhid_pad = _round_up(max(nhid, LANE), LANE)
    c_pad = _round_up(max(num_classes, LANE), LANE)   # handles num_classes > 128 too

    tm, n_pad, est = _pick_row_tile(n, nhid_pad, c_pad)
    grid = (n_pad // tm,)
    vmem_limit = int(min(max(est, 32 << 20), 60 << 20))
    cparams = pltpu.CompilerParams(dimension_semantics=("parallel",),
                                   vmem_limit_bytes=vmem_limit)
    # TODO(synk): for realistic sparse graphs, replace the dense N^2 A_hat propagation with
    # a scalar-prefetch / block-sparse gather path; dense MXU matmuls only for X@W / h@W.

    # Host-side zero padding (padded A rows/cols are zero, so padded nodes never leak
    # into real rows; padded feature/class lanes stay exactly zero through both layers).
    a_p = jnp.pad(a_hat, ((0, n_pad - n), (0, n_pad - n))).astype(compute_dtype)
    x_p = jnp.pad(x, ((0, n_pad - n), (0, 0))).astype(compute_dtype)

    w1p = jnp.pad(params["w1"], ((0, 0), (0, nhid_pad - nhid)))
    v1p = jnp.pad(params["v1"], ((0, 0), (0, nhid_pad - nhid)))
    wcat1 = jnp.concatenate([w1p, v1p], axis=1).astype(compute_dtype)
    b1p = jnp.pad(params["b1"], (0, nhid_pad - nhid)).reshape(1, nhid_pad).astype(jnp.float32)

    w2p = jnp.pad(params["w2"], ((0, nhid_pad - nhid), (0, c_pad - num_classes)))
    v2p = jnp.pad(params["v2"], ((0, nhid_pad - nhid), (0, c_pad - num_classes)))
    w2cat = jnp.concatenate([w2p, v2p], axis=1).astype(compute_dtype)
    b2p = jnp.pad(params["b2"], (0, c_pad - num_classes)).reshape(1, c_pad).astype(jnp.float32)

    cmask = jnp.where(jnp.arange(c_pad) < num_classes, 0.0, -1e30)
    cmask = cmask.reshape(1, c_pad).astype(jnp.float32)

    row_tile = lambda i: (i, 0)
    whole = lambda i: (0, 0)

    # ---- Call 1: layer-1 feature transform ----
    xw1, xr1 = pl.pallas_call(
        functools.partial(_transform1_kernel, nhid_pad=nhid_pad),
        out_shape=(jax.ShapeDtypeStruct((n_pad, nhid_pad), compute_dtype),
                   jax.ShapeDtypeStruct((n_pad, nhid_pad), jnp.float32)),
        grid=grid,
        in_specs=[pl.BlockSpec((tm, f_in), row_tile),
                  pl.BlockSpec((f_in, 2 * nhid_pad), whole),
                  pl.BlockSpec((1, nhid_pad), whole)],
        out_specs=(pl.BlockSpec((tm, nhid_pad), row_tile),
                   pl.BlockSpec((tm, nhid_pad), row_tile)),
        compiler_params=cparams,
        cost_estimate=pl.CostEstimate(
            flops=2 * n_pad * f_in * 2 * nhid_pad,
            transcendentals=0,
            bytes_accessed=n_pad * f_in * 2 + f_in * 2 * nhid_pad * 2
                           + n_pad * nhid_pad * (2 + 4)),
    )(x_p, wcat1, b1p)

    # ---- Call 2: layer-1 propagation + ReLU, fused with layer-2 transform ----
    hw2, hr2 = pl.pallas_call(
        functools.partial(_prop1_transform2_kernel, c_pad=c_pad),
        out_shape=(jax.ShapeDtypeStruct((n_pad, c_pad), compute_dtype),
                   jax.ShapeDtypeStruct((n_pad, c_pad), jnp.float32)),
        grid=grid,
        in_specs=[pl.BlockSpec((tm, n_pad), row_tile),
                  pl.BlockSpec((n_pad, nhid_pad), whole),
                  pl.BlockSpec((tm, nhid_pad), row_tile),
                  pl.BlockSpec((nhid_pad, 2 * c_pad), whole),
                  pl.BlockSpec((1, c_pad), whole)],
        out_specs=(pl.BlockSpec((tm, c_pad), row_tile),
                   pl.BlockSpec((tm, c_pad), row_tile)),
        compiler_params=cparams,
        cost_estimate=pl.CostEstimate(
            flops=2 * n_pad * n_pad * nhid_pad + 2 * n_pad * nhid_pad * 2 * c_pad,
            transcendentals=0,
            bytes_accessed=n_pad * n_pad * 2 + n_pad * nhid_pad * (2 + 4)
                           + nhid_pad * 2 * c_pad * 2 + n_pad * c_pad * (2 + 4)),
    )(a_p, xw1, xr1, w2cat, b2p)

    # ---- Call 3: layer-2 propagation + ReLU + softmax ----
    out_pad = pl.pallas_call(
        _prop2_softmax_kernel,
        out_shape=jax.ShapeDtypeStruct((n_pad, c_pad), jnp.float32),
        grid=grid,
        in_specs=[pl.BlockSpec((tm, n_pad), row_tile),
                  pl.BlockSpec((n_pad, c_pad), whole),
                  pl.BlockSpec((tm, c_pad), row_tile),
                  pl.BlockSpec((1, c_pad), whole)],
        out_specs=pl.BlockSpec((tm, c_pad), row_tile),
        compiler_params=cparams,
        cost_estimate=pl.CostEstimate(
            flops=2 * n_pad * n_pad * c_pad,
            transcendentals=n_pad * c_pad,
            bytes_accessed=n_pad * n_pad * 2 + n_pad * c_pad * (2 + 4 + 4) + c_pad * 4),
    )(a_p, hw2, hr2, cmask)

    return out_pad[:n, :num_classes]


# -------------------------------- glue (JAX) ------------------------------- #

def gcn_norm_dense(edge_index, num_nodes):
    """Dense D^{-1/2} A D^{-1/2} (no self-loops), matching ARMAConv's gcn_norm call."""
    src, dst = edge_index[0], edge_index[1]
    a = jnp.zeros((num_nodes, num_nodes), jnp.float32).at[dst, src].add(1.0)
    deg = a.sum(axis=1)
    dinv = jnp.where(deg > 0, jax.lax.rsqrt(deg), 0.0)
    return dinv[:, None] * a * dinv[None, :]


def glorot(key, shape):
    fan_in, fan_out = shape
    limit = jnp.sqrt(6.0 / (fan_in + fan_out))
    return jax.random.uniform(key, shape, jnp.float32, -limit, limit)


def arma_forward_ref(params, x, a_hat):
    """Pure-JAX f32 reference of the PyTorch forward (eval mode)."""
    h = jnp.maximum(a_hat @ (x @ params["w1"]) + x @ params["v1"] + params["b1"], 0.0)
    h = jnp.maximum(h, 0.0)                       # F.relu (idempotent)
    logits = jnp.maximum(a_hat @ (h @ params["w2"]) + h @ params["v2"] + params["b2"], 0.0)
    return jax.nn.softmax(logits, axis=1)


# ---------------------------------- main ----------------------------------- #

if __name__ == "__main__":
    key = jax.random.PRNGKey(0)
    k_x, k_w1, k_v1, k_b1, k_w2, k_v2, k_b2 = jax.random.split(key, 7)

    num_nodes = 128
    num_node_features = 16
    nhid = 32
    num_classes = 8

    # Node features.
    x = jax.random.normal(k_x, (num_nodes, num_node_features), jnp.float32)

    # Simple symmetric ring graph as edge_index (2, E).
    idx = jnp.arange(num_nodes, dtype=jnp.int32)
    nxt = (idx + 1) % num_nodes
    edge_index = jnp.stack(
        [jnp.concatenate([idx, nxt]), jnp.concatenate([nxt, idx])], axis=0)

    a_hat = gcn_norm_dense(edge_index, num_nodes)

    # Deterministic parameter init (ARMAConv: init_weight W, root_weight V, bias b).
    params = {
        "w1": glorot(k_w1, (num_node_features, nhid)),
        "v1": glorot(k_v1, (num_node_features, nhid)),
        "b1": 0.1 * jax.random.normal(k_b1, (nhid,), jnp.float32),
        "w2": glorot(k_w2, (nhid, num_classes)),
        "v2": glorot(k_v2, (nhid, num_classes)),
        "b2": 0.1 * jax.random.normal(k_b2, (num_classes,), jnp.float32),
    }

    out = jax.jit(arma_forward)(params, x, a_hat)
    out = jax.block_until_ready(out)

    assert out.shape == (num_nodes, num_classes)
    # Softmax rows sum to 1 (exact f32 divide -> tight tolerance).
    assert jnp.allclose(out.sum(axis=1), 1.0, atol=1e-3)
    # Sanity check against the pure-JAX f32 reference (bf16 compute -> coarse tolerance).
    ref = jax.block_until_ready(arma_forward_ref(params, x, a_hat))
    assert jnp.allclose(out, ref, atol=1e-1)

    print("KERNEL_OK")
</pallas_src>

<mosaic_0001>
module attributes {stable_mosaic.version = 11 : i64} {
  func.func @_transform1_kernel(%arg0: i32, %arg1: memref<128x16xbf16, #tpu.memory_space<vmem>>, %arg2: memref<16x256xbf16, #tpu.memory_space<vmem>>, %arg3: memref<1x128xf32, #tpu.memory_space<vmem>>, %arg4: memref<128x128xbf16, #tpu.memory_space<vmem>>, %arg5: memref<128x128xf32, #tpu.memory_space<vmem>>) attributes {dimension_semantics = [#tpu.dimension_semantics<parallel>], iteration_bounds = array<i64: 1>, scalar_prefetch = 0 : i64, scratch_operands = 0 : i64, tpu.core_type = #tpu.core_type<tc>, window_params = [{transform_indices = @transform_0, window_bounds = array<i64: 128, 16>}, {pipeline_mode = #tpu.pipeline_mode<synchronous>, transform_indices = @transform_1, window_bounds = array<i64: 16, 256>}, {pipeline_mode = #tpu.pipeline_mode<synchronous>, transform_indices = @transform_2, window_bounds = array<i64: 1, 128>}, {transform_indices = @transform_3, window_bounds = array<i64: 128, 128>}, {transform_indices = @transform_4, window_bounds = array<i64: 128, 128>}]} {
    %c0 = arith.constant 0 : index
    %c0_0 = arith.constant 0 : index
    %0 = vector.load %arg1[%c0, %c0_0] : memref<128x16xbf16, #tpu.memory_space<vmem>>, vector<128x16xbf16>
    %c0_1 = arith.constant 0 : index
    %c0_2 = arith.constant 0 : index
    %1 = vector.load %arg2[%c0_1, %c0_2] : memref<16x256xbf16, #tpu.memory_space<vmem>>, vector<16x256xbf16>
    %cst = arith.constant dense<0.000000e+00> : vector<128x256xf32>
    %2 = tpu.matmul %0, %1, %cst {dimension_numbers = #tpu.dot_dimension_numbers<[1], [0], [0], [1], [0, 0, 1, 1], [], []>} : vector<128x16xbf16>, vector<16x256xbf16>, vector<128x256xf32> -> vector<128x256xf32>
    %3 = vector.extract_strided_slice %2 {offsets = [0, 0], sizes = [128, 128], strides = [1, 1]} : vector<128x256xf32> to vector<128x128xf32>
    %4 = arith.truncf %3 : vector<128x128xf32> to vector<128x128xbf16>
    %c0_3 = arith.constant 0 : index
    %c0_4 = arith.constant 0 : index
    %5 = vector.load %arg4[%c0_3, %c0_4] : memref<128x128xbf16, #tpu.memory_space<vmem>>, vector<128x128xbf16>
    tpu.vector_store %arg4[%c0_3, %c0_4], %4 {strides = array<i32>} : memref<128x128xbf16, #tpu.memory_space<vmem>>, vector<128x128xbf16>,
    %6 = vector.extract_strided_slice %2 {offsets = [0, 128], sizes = [128, 128], strides = [1, 1]} : vector<128x256xf32> to vector<128x128xf32>
    %c0_5 = arith.constant 0 : index
    %c0_6 = arith.constant 0 : index
    %7 = vector.load %arg3[%c0_5, %c0_6] : memref<1x128xf32, #tpu.memory_space<vmem>>, vector<1x128xf32>
    %8 = vector.broadcast %7 : vector<1x128xf32> to vector<128x128xf32>
    %9 = arith.addf %6, %8 : vector<128x128xf32>
    %c0_7 = arith.constant 0 : index
    %c0_8 = arith.constant 0 : index
    %10 = vector.load %arg5[%c0_7, %c0_8] : memref<128x128xf32, #tpu.memory_space<vmem>>, vector<128x128xf32>
    tpu.vector_store %arg5[%c0_7, %c0_8], %9 {strides = array<i32>} : memref<128x128xf32, #tpu.memory_space<vmem>>, vector<128x128xf32>,
    return
  }
  func.func @transform_0(%arg0: i32) -> (i32, i32) {
    %c0_i32 = arith.constant 0 : i32
    %c0_i32_0 = arith.constant 0 : i32
    return %arg0, %c0_i32 : i32, i32
  }
  func.func @transform_1(%arg0: i32) -> (i32, i32) {
    %c0_i32 = arith.constant 0 : i32
    %c0_i32_0 = arith.constant 0 : i32
    %c0_i32_1 = arith.constant 0 : i32
    return %c0_i32, %c0_i32_0 : i32, i32
  }
  func.func @transform_2(%arg0: i32) -> (i32, i32) {
    %c0_i32 = arith.constant 0 : i32
    %c0_i32_0 = arith.constant 0 : i32
    %c0_i32_1 = arith.constant 0 : i32
    return %c0_i32, %c0_i32_0 : i32, i32
  }
  func.func @transform_3(%arg0: i32) -> (i32, i32) {
    %c0_i32 = arith.constant 0 : i32
    %c0_i32_0 = arith.constant 0 : i32
    return %arg0, %c0_i32 : i32, i32
  }
  func.func @transform_4(%arg0: i32) -> (i32, i32) {
    %c0_i32 = arith.constant 0 : i32
    %c0_i32_0 = arith.constant 0 : i32
    return %arg0, %c0_i32 : i32, i32
  }
}

module attributes {stable_mosaic.version = 11 : i64} {
  func.func @_prop1_transform2_kernel(%arg0: i32, %arg1: memref<128x128xbf16, #tpu.memory_space<vmem>>, %arg2: memref<128x128xbf16, #tpu.memory_space<vmem>>, %arg3: memref<128x128xf32, #tpu.memory_space<vmem>>, %arg4: memref<128x256xbf16, #tpu.memory_space<vmem>>, %arg5: memref<1x128xf32, #tpu.memory_space<vmem>>, %arg6: memref<128x128xbf16, #tpu.memory_space<vmem>>, %arg7: memref<128x128xf32, #tpu.memory_space<vmem>>) attributes {dimension_semantics = [#tpu.dimension_semantics<parallel>], iteration_bounds = array<i64: 1>, scalar_prefetch = 0 : i64, scratch_operands = 0 : i64, tpu.core_type = #tpu.core_type<tc>, window_params = [{transform_indices = @transform_0, window_bounds = array<i64: 128, 128>}, {pipeline_mode = #tpu.pipeline_mode<synchronous>, transform_indices = @transform_1, window_bounds = array<i64: 128, 128>}, {transform_indices = @transform_2, window_bounds = array<i64: 128, 128>}, {pipeline_mode = #tpu.pipeline_mode<synchronous>, transform_indices = @transform_3, window_bounds = array<i64: 128, 256>}, {pipeline_mode = #tpu.pipeline_mode<synchronous>, transform_indices = @transform_4, window_bounds = array<i64: 1, 128>}, {transform_indices = @transform_5, window_bounds = array<i64: 128, 128>}, {transform_indices = @transform_6, window_bounds = array<i64: 128, 128>}]} {
    %c0 = arith.constant 0 : index
    %c0_0 = arith.constant 0 : index
    %0 = vector.load %arg1[%c0, %c0_0] : memref<128x128xbf16, #tpu.memory_space<vmem>>, vector<128x128xbf16>
    %c0_1 = arith.constant 0 : index
    %c0_2 = arith.constant 0 : index
    %1 = vector.load %arg2[%c0_1, %c0_2] : memref<128x128xbf16, #tpu.memory_space<vmem>>, vector<128x128xbf16>
    %cst = arith.constant dense<0.000000e+00> : vector<128x128xf32>
    %2 = tpu.matmul %0, %1, %cst {dimension_numbers = #tpu.dot_dimension_numbers<[1], [0], [0], [1], [0, 0, 1, 1], [], []>} : vector<128x128xbf16>, vector<128x128xbf16>, vector<128x128xf32> -> vector<128x128xf32>
    %c0_3 = arith.constant 0 : index
    %c0_4 = arith.constant 0 : index
    %3 = vector.load %arg3[%c0_3, %c0_4] : memref<128x128xf32, #tpu.memory_space<vmem>>, vector<128x128xf32>
    %4 = arith.addf %2, %3 : vector<128x128xf32>
    %cst_5 = arith.constant 0.000000e+00 : f32
    %5 = vector.broadcast %cst_5 : f32 to vector<128x128xf32>
    %6 = arith.maximumf %4, %5 : vector<128x128xf32>
    %7 = arith.truncf %6 : vector<128x128xf32> to vector<128x128xbf16>
    %c0_6 = arith.constant 0 : index
    %c0_7 = arith.constant 0 : index
    %8 = vector.load %arg4[%c0_6, %c0_7] : memref<128x256xbf16, #tpu.memory_space<vmem>>, vector<128x256xbf16>
    %cst_8 = arith.constant dense<0.000000e+00> : vector<128x256xf32>
    %9 = tpu.matmul %7, %8, %cst_8 {dimension_numbers = #tpu.dot_dimension_numbers<[1], [0], [0], [1], [0, 0, 1, 1], [], []>} : vector<128x128xbf16>, vector<128x256xbf16>, vector<128x256xf32> -> vector<128x256xf32>
    %10 = vector.extract_strided_slice %9 {offsets = [0, 0], sizes = [128, 128], strides = [1, 1]} : vector<128x256xf32> to vector<128x128xf32>
    %11 = arith.truncf %10 : vector<128x128xf32> to vector<128x128xbf16>
    %c0_9 = arith.constant 0 : index
    %c0_10 = arith.constant 0 : index
    %12 = vector.load %arg6[%c0_9, %c0_10] : memref<128x128xbf16, #tpu.memory_space<vmem>>, vector<128x128xbf16>
    tpu.vector_store %arg6[%c0_9, %c0_10], %11 {strides = array<i32>} : memref<128x128xbf16, #tpu.memory_space<vmem>>, vector<128x128xbf16>,
    %13 = vector.extract_strided_slice %9 {offsets = [0, 128], sizes = [128, 128], strides = [1, 1]} : vector<128x256xf32> to vector<128x128xf32>
    %c0_11 = arith.constant 0 : index
    %c0_12 = arith.constant 0 : index
    %14 = vector.load %arg5[%c0_11, %c0_12] : memref<1x128xf32, #tpu.memory_space<vmem>>, vector<1x128xf32>
    %15 = vector.broadcast %14 : vector<1x128xf32> to vector<128x128xf32>
    %16 = arith.addf %13, %15 : vector<128x128xf32>
    %c0_13 = arith.constant 0 : index
    %c0_14 = arith.constant 0 : index
    %17 = vector.load %arg7[%c0_13, %c0_14] : memref<128x128xf32, #tpu.memory_space<vmem>>, vector<128x128xf32>
    tpu.vector_store %arg7[%c0_13, %c0_14], %16 {strides = array<i32>} : memref<128x128xf32, #tpu.memory_space<vmem>>, vector<128x128xf32>,
    return
  }
  func.func @transform_0(%arg0: i32) -> (i32, i32) {
    %c0_i32 = arith.constant 0 : i32
    %c0_i32_0 = arith.constant 0 : i32
    return %arg0, %c0_i32 : i32, i32
  }
  func.func @transform_1(%arg0: i32) -> (i32, i32) {
    %c0_i32 = arith.constant 0 : i32
    %c0_i32_0 = arith.constant 0 : i32
    %c0_i32_1 = arith.constant 0 : i32
    return %c0_i32, %c0_i32_0 : i32, i32
  }
  func.func @transform_2(%arg0: i32) -> (i32, i32) {
    %c0_i32 = arith.constant 0 : i32
    %c0_i32_0 = arith.constant 0 : i32
    return %arg0, %c0_i32 : i32, i32
  }
  func.func @transform_3(%arg0: i32) -> (i32, i32) {
    %c0_i32 = arith.constant 0 : i32
    %c0_i32_0 = arith.constant 0 : i32
    %c0_i32_1 = arith.constant 0 : i32
    return %c0_i32, %c0_i32_0 : i32, i32
  }
  func.func @transform_4(%arg0: i32) -> (i32, i32) {
    %c0_i32 = arith.constant 0 : i32
    %c0_i32_0 = arith.constant 0 : i32
    %c0_i32_1 = arith.constant 0 : i32
    return %c0_i32, %c0_i32_0 : i32, i32
  }
  func.func @transform_5(%arg0: i32) -> (i32, i32) {
    %c0_i32 = arith.constant 0 : i32
    %c0_i32_0 = arith.constant 0 : i32
    return %arg0, %c0_i32 : i32, i32
  }
  func.func @transform_6(%arg0: i32) -> (i32, i32) {
    %c0_i32 = arith.constant 0 : i32
    %c0_i32_0 = arith.constant 0 : i32
    return %arg0, %c0_i32 : i32, i32
  }
}

module attributes {stable_mosaic.version = 11 : i64} {
  func.func @_prop2_softmax_kernel(%arg0: i32, %arg1: memref<128x128xbf16, #tpu.memory_space<vmem>>, %arg2: memref<128x128xbf16, #tpu.memory_space<vmem>>, %arg3: memref<128x128xf32, #tpu.memory_space<vmem>>, %arg4: memref<1x128xf32, #tpu.memory_space<vmem>>, %arg5: memref<128x128xf32, #tpu.memory_space<vmem>>) attributes {dimension_semantics = [#tpu.dimension_semantics<parallel>], iteration_bounds = array<i64: 1>, scalar_prefetch = 0 : i64, scratch_operands = 0 : i64, tpu.core_type = #tpu.core_type<tc>, window_params = [{transform_indices = @transform_0, window_bounds = array<i64: 128, 128>}, {pipeline_mode = #tpu.pipeline_mode<synchronous>, transform_indices = @transform_1, window_bounds = array<i64: 128, 128>}, {transform_indices = @transform_2, window_bounds = array<i64: 128, 128>}, {pipeline_mode = #tpu.pipeline_mode<synchronous>, transform_indices = @transform_3, window_bounds = array<i64: 1, 128>}, {transform_indices = @transform_4, window_bounds = array<i64: 128, 128>}]} {
    %c0 = arith.constant 0 : index
    %c0_0 = arith.constant 0 : index
    %0 = vector.load %arg1[%c0, %c0_0] : memref<128x128xbf16, #tpu.memory_space<vmem>>, vector<128x128xbf16>
    %c0_1 = arith.constant 0 : index
    %c0_2 = arith.constant 0 : index
    %1 = vector.load %arg2[%c0_1, %c0_2] : memref<128x128xbf16, #tpu.memory_space<vmem>>, vector<128x128xbf16>
    %cst = arith.constant dense<0.000000e+00> : vector<128x128xf32>
    %2 = tpu.matmul %0, %1, %cst {dimension_numbers = #tpu.dot_dimension_numbers<[1], [0], [0], [1], [0, 0, 1, 1], [], []>} : vector<128x128xbf16>, vector<128x128xbf16>, vector<128x128xf32> -> vector<128x128xf32>
    %c0_3 = arith.constant 0 : index
    %c0_4 = arith.constant 0 : index
    %3 = vector.load %arg3[%c0_3, %c0_4] : memref<128x128xf32, #tpu.memory_space<vmem>>, vector<128x128xf32>
    %4 = arith.addf %2, %3 : vector<128x128xf32>
    %cst_5 = arith.constant 0.000000e+00 : f32
    %5 = vector.broadcast %cst_5 : f32 to vector<128x128xf32>
    %6 = arith.maximumf %4, %5 : vector<128x128xf32>
    %c0_6 = arith.constant 0 : index
    %c0_7 = arith.constant 0 : index
    %7 = vector.load %arg4[%c0_6, %c0_7] : memref<1x128xf32, #tpu.memory_space<vmem>>, vector<1x128xf32>
    %8 = vector.broadcast %7 : vector<1x128xf32> to vector<128x128xf32>
    %9 = arith.addf %6, %8 : vector<128x128xf32>
    %cst_8 = arith.constant dense<0xFF800000> : vector<128xf32>
    %10 = vector.multi_reduction <maximumf>, %9, %cst_8 [1] : vector<128x128xf32> to vector<128xf32>
    %11 = vector.shape_cast %10 : vector<128xf32> to vector<128x1xf32>
    %12 = vector.broadcast %11 : vector<128x1xf32> to vector<128x128xf32>
    %13 = arith.subf %9, %12 : vector<128x128xf32>
    %14 = math.exp %13 : vector<128x128xf32>
    %cst_9 = arith.constant dense<0.000000e+00> : vector<128xf32>
    %15 = vector.multi_reduction <add>, %14, %cst_9 [1] : vector<128x128xf32> to vector<128xf32>
    %16 = vector.shape_cast %15 : vector<128xf32> to vector<128x1xf32>
    %17 = vector.broadcast %16 : vector<128x1xf32> to vector<128x128xf32>
    %18 = arith.divf %14, %17 : vector<128x128xf32>
    %c0_10 = arith.constant 0 : index
    %c0_11 = arith.constant 0 : index
    %19 = vector.load %arg5[%c0_10, %c0_11] : memref<128x128xf32, #tpu.memory_space<vmem>>, vector<128x128xf32>
    tpu.vector_store %arg5[%c0_10, %c0_11], %18 {strides = array<i32>} : memref<128x128xf32, #tpu.memory_space<vmem>>, vector<128x128xf32>,
    return
  }
  func.func @transform_0(%arg0: i32) -> (i32, i32) {
    %c0_i32 = arith.constant 0 : i32
    %c0_i32_0 = arith.constant 0 : i32
    return %arg0, %c0_i32 : i32, i32
  }
  func.func @transform_1(%arg0: i32) -> (i32, i32) {
    %c0_i32 = arith.constant 0 : i32
    %c0_i32_0 = arith.constant 0 : i32
    %c0_i32_1 = arith.constant 0 : i32
    return %c0_i32, %c0_i32_0 : i32, i32
  }
  func.func @transform_2(%arg0: i32) -> (i32, i32) {
    %c0_i32 = arith.constant 0 : i32
    %c0_i32_0 = arith.constant 0 : i32
    return %arg0, %c0_i32 : i32, i32
  }
  func.func @transform_3(%arg0: i32) -> (i32, i32) {
    %c0_i32 = arith.constant 0 : i32
    %c0_i32_0 = arith.constant 0 : i32
    %c0_i32_1 = arith.constant 0 : i32
    return %c0_i32, %c0_i32_0 : i32, i32
  }
  func.func @transform_4(%arg0: i32) -> (i32, i32) {
    %c0_i32 = arith.constant 0 : i32
    %c0_i32_0 = arith.constant 0 : i32
    return %arg0, %c0_i32 : i32, i32
  }
}

</mosaic_0001>

<llo_original>
// kernel: arma_forward.5
$region0: #{arma_forward.5}
  #allocation0 [shape = 'u32[]', space=smem, size = 0x4, offset = 0x4, fixed_abs, tag = 'smem constant byte address 0x4 - core index']
  #allocation1 [shape = 'u32[144,128]{1,0:T(1,128)}', space=vmem, size = 0x12000, scoped, tag = 'internal scratch']
  %s0 = inlined_call_operand.vmem [shape: bf16[128,128], index: 0, kind: input, shape index: {}]
  %s1 = inlined_call_operand.vmem [shape: bf16[128,128], index: 1, kind: input, shape index: {}]
  %s2 = inlined_call_operand.vmem [shape: f32[128,128], index: 2, kind: input, shape index: {}]
  %s3 = inlined_call_operand.vmem [shape: f32[1,128], index: 3, kind: input, shape index: {}]
  %s4 = inlined_call_operand.vmem [shape: f32[128,128], index: 4, kind: output, shape index: {}]
  %s5 = sld [smem:[#allocation0]]
  $region26: #{arma_forward.5} parent=0
    _
  %s7 = ssub.s32 1, %s5
  %s8 = scalar_select 0, %s7, %s5
  // Predicated region
  $region2: #{arma_forward.5} parent=0 // pred_check
    _
  $region3: #{arma_forward.5} parent=0 // pred_check_branch
    %10 = sbr.rel (0) target = $region5
  $region4: #{arma_forward.5} parent=0 // pred_region
    _
  $region5: #{arma_forward.5} parent=0 // pred_fallthru
    _
  // Predicated region
  $region6: #{arma_forward.5} parent=0 // pred_check
    _
  $region7: #{arma_forward.5} parent=0 // pred_check_branch
    %12 = sbr.rel (0) target = $region9
  $region8: #{arma_forward.5} parent=0 // pred_region
    _
  $region9: #{arma_forward.5} parent=0 // pred_fallthru
    _
  // Predicated region
  $region10: #{arma_forward.5} parent=0 // pred_check
    _
  $region11: #{arma_forward.5} parent=0 // pred_check_branch
    %14 = sbr.rel (0) target = $region13
  $region12: #{arma_forward.5} parent=0 // pred_region
    _
  $region13: #{arma_forward.5} parent=0 // pred_fallthru
    _
  // Predicated region
  $region14: #{arma_forward.5} parent=0 // pred_check
    _
  $region15: #{arma_forward.5} parent=0 // pred_check_branch
    %16 = sbr.rel (0) target = $region17
  $region16: #{arma_forward.5} parent=0 // pred_region
    _
  $region17: #{arma_forward.5} parent=0 // pred_fallthru
    _
  %v18 = vld [vmem:[%s0] sm:$0xf]
  %v19 = vld [vmem:[%s0 + $0x4] sm:$0xf]
  %v20 = vld [vmem:[%s0 + $0x8] sm:$0xf]
  %v21 = vld [vmem:[%s0 + $0xc] sm:$0xf]
  %v22 = vld [vmem:[%s0 + $0x10] sm:$0xf]
  %v23 = vld [vmem:[%s0 + $0x14] sm:$0xf]
  %v24 = vld [vmem:[%s0 + $0x18] sm:$0xf]
  %v25 = vld [vmem:[%s0 + $0x1c] sm:$0xf]
  %v26 = vld [vmem:[%s0 + $0x20] sm:$0xf]
  %v27 = vld [vmem:[%s0 + $0x24] sm:$0xf]
  %v28 = vld [vmem:[%s0 + $0x28] sm:$0xf]
  %v29 = vld [vmem:[%s0 + $0x2c] sm:$0xf]
  %v30 = vld [vmem:[%s0 + $0x30] sm:$0xf]
  %v31 = vld [vmem:[%s0 + $0x34] sm:$0xf]
  %v32 = vld [vmem:[%s0 + $0x38] sm:$0xf]
  %v33 = vld [vmem:[%s0 + $0x3c] sm:$0xf]
  %v34 = vld [vmem:[%s1] sm:$0xf]
  %v35 = vld [vmem:[%s1 + $0x4] sm:$0xf]
  %v36 = vld [vmem:[%s1 + $0x8] sm:$0xf]
  %v37 = vld [vmem:[%s1 + $0xc] sm:$0xf]
  %v38 = vld [vmem:[%s1 + $0x10] sm:$0xf]
  %v39 = vld [vmem:[%s1 + $0x14] sm:$0xf]
  %v40 = vld [vmem:[%s1 + $0x18] sm:$0xf]
  %v41 = vld [vmem:[%s1 + $0x1c] sm:$0xf]
  %v42 = vld [vmem:[%s1 + $0x20] sm:$0xf]
  %v43 = vld [vmem:[%s1 + $0x24] sm:$0xf]
  %v44 = vld [vmem:[%s1 + $0x28] sm:$0xf]
  %v45 = vld [vmem:[%s1 + $0x2c] sm:$0xf]
  %v46 = vld [vmem:[%s1 + $0x30] sm:$0xf]
  %v47 = vld [vmem:[%s1 + $0x34] sm:$0xf]
  %v48 = vld [vmem:[%s1 + $0x38] sm:$0xf]
  %v49 = vld [vmem:[%s1 + $0x3c] sm:$0xf]
  %v50 = vld [vmem:[%s2] sm:$0xff]
  %v51 = vld [vmem:[%s2 + $0x8] sm:$0xff]
  %v52 = vld [vmem:[%s2 + $0x10] sm:$0xff]
  %v53 = vld [vmem:[%s2 + $0x18] sm:$0xff]
  %v54 = vld [vmem:[%s2 + $0x20] sm:$0xff]
  %v55 = vld [vmem:[%s2 + $0x28] sm:$0xff]
  %v56 = vld [vmem:[%s2 + $0x30] sm:$0xff]
  %v57 = vld [vmem:[%s2 + $0x38] sm:$0xff]
  %v58 = vld [vmem:[%s2 + $0x40] sm:$0xff]
  %v59 = vld [vmem:[%s2 + $0x48] sm:$0xff]
  %v60 = vld [vmem:[%s2 + $0x50] sm:$0xff]
  %v61 = vld [vmem:[%s2 + $0x58] sm:$0xff]
  %v62 = vld [vmem:[%s2 + $0x60] sm:$0xff]
  %v63 = vld [vmem:[%s2 + $0x68] sm:$0xff]
  %v64 = vld [vmem:[%s2 + $0x70] sm:$0xff]
  %v65 = vld [vmem:[%s2 + $0x78] sm:$0xff]
  %v82 = vunpack.c.l.b16 %v18
  %v83 = vunpack.c.l.b16 %v19
  %v84 = vunpack.c.l.b16 %v20
  %v85 = vunpack.c.l.b16 %v21
  %v86 = vunpack.c.l.b16 %v22
  %v87 = vunpack.c.l.b16 %v23
  %v88 = vunpack.c.l.b16 %v24
  %v89 = vunpack.c.l.b16 %v25
  %v90 = vunpack.c.l.b16 %v26
  %v91 = vunpack.c.l.b16 %v27
  %v92 = vunpack.c.l.b16 %v28
  %v93 = vunpack.c.l.b16 %v29
  %v94 = vunpack.c.l.b16 %v30
  %v95 = vunpack.c.l.b16 %v31
  %v96 = vunpack.c.l.b16 %v32
  %v97 = vunpack.c.l.b16 %v33
  %v98 = vpack.c.b16 %v83, %v82
  %v99 = vpack.c.b16 %v85, %v84
  %v100 = vpack.c.b16 %v87, %v86
  %v101 = vpack.c.b16 %v89, %v88
  %v102 = vpack.c.b16 %v91, %v90
  %v103 = vpack.c.b16 %v93, %v92
  %v104 = vpack.c.b16 %v95, %v94
  %v105 = vpack.c.b16 %v97, %v96
  %v130 = vunpack.c.l.b16 %v34
  %v131 = vunpack.c.l.b16 %v35
  %v132 = vunpack.c.l.b16 %v36
  %v133 = vunpack.c.l.b16 %v37
  %v134 = vunpack.c.l.b16 %v38
  %v135 = vunpack.c.l.b16 %v39
  %v136 = vunpack.c.l.b16 %v40
  %v137 = vunpack.c.l.b16 %v41
  %v138 = vunpack.c.l.b16 %v42
  %v139 = vunpack.c.l.b16 %v43
  %v140 = vunpack.c.l.b16 %v44
  %v141 = vunpack.c.l.b16 %v45
  %v142 = vunpack.c.l.b16 %v46
  %v143 = vunpack.c.l.b16 %v47
  %v144 = vunpack.c.l.b16 %v48
  %v145 = vunpack.c.l.b16 %v49
  %v146 = vpack.c.b16 %v131, %v130
  %v147 = vpack.c.b16 %v133, %v132
  %v148 = vpack.c.b16 %v135, %v134
  %v149 = vpack.c.b16 %v137, %v136
  %v150 = vpack.c.b16 %v139, %v138
  %v151 = vpack.c.b16 %v141, %v140
  %v152 = vpack.c.b16 %v143, %v142
  %v153 = vpack.c.b16 %v145, %v144
  %162 = vmatprep.subr.bf16.mxu0 0
  %163 = vmatpush1.bf16.msra.mxu0 %v153
  %164 = vmatprep.subr.bf16.mxu0 0
  %165 = vmatpush1.bf16.msra.mxu0 %v152
  %166 = vmatprep.subr.bf16.mxu0 0
  %167 = vmatpush1.bf16.msra.mxu0 %v151
  %168 = vmatprep.subr.bf16.mxu0 0
  %169 = vmatpush1.bf16.msra.mxu0 %v150
  %170 = vmatprep.subr.bf16.mxu0 0
  %171 = vmatpush1.bf16.msra.mxu0 %v149
  %172 = vmatprep.subr.bf16.mxu0 0
  %173 = vmatpush1.bf16.msra.mxu0 %v148
  %174 = vmatprep.subr.bf16.mxu0 0
  %175 = vmatpush1.bf16.msra.mxu0 %v147
  %176 = vmatprep.subr.bf16.mxu0 0
  %177 = vmatpush1.bf16.msra.mxu0 %v146
  %178 = vmatprep.subr.bf16.mxu0 0
  %179 = vmatpush2.bf16.msra.mxu0 0
  %180 = vmatprep.subr.bf16.mxu0 0
  %181 = vmatpush2.bf16.msra.mxu0 0
  %182 = vmatprep.subr.bf16.mxu0 0
  %183 = vmatpush2.bf16.msra.mxu0 0
  %184 = vmatprep.subr.bf16.mxu0 0
  %185 = vmatpush2.bf16.msra.mxu0 0
  %186 = vmatprep.subr.bf16.mxu0 0
  %187 = vmatpush2.bf16.msra.mxu0 0
  %188 = vmatprep.subr.bf16.mxu0 0
  %189 = vmatpush2.bf16.msra.mxu0 0
  %190 = vmatprep.subr.bf16.mxu0 0
  %191 = vmatpush2.bf16.msra.mxu0 0
  %192 = vmatprep.subr.bf16.mxu0 0
  %193 = vmatpush2.bf16.msra.mxu0 0
  %194 = vmatprep.mubr.bf16.mxu0 0
  %195 = vmatmul.mubr.bf16.gmra.mxu0 %v98
  %v196 = vpop.f32.mrf.mxu0
  %v197 = vadd.f32 %v50, %v196
  %v198 = vpop.f32.mrf.mxu0
  %v199 = vpop.f32.mrf.mxu0
  %v200 = vadd.f32 %v51, %v199
  %v201 = vpop.f32.mrf.mxu0
  %202 = vmatprep.mubr.bf16.mxu0 0
  %203 = vmatmul.mubr.bf16.gmra.mxu0 %v99
  %v204 = vpop.f32.mrf.mxu0
  %v205 = vadd.f32 %v52, %v204
  %v206 = vpop.f32.mrf.mxu0
  %v207 = vpop.f32.mrf.mxu0
  %v208 = vadd.f32 %v53, %v207
  %v209 = vpop.f32.mrf.mxu0
  %210 = vmatprep.mubr.bf16.mxu0 0
  %211 = vmatmul.mubr.bf16.gmra.mxu0 %v100
  %v212 = vpop.f32.mrf.mxu0
  %v213 = vadd.f32 %v54, %v212
  %v214 = vpop.f32.mrf.mxu0
  %v215 = vpop.f32.mrf.mxu0
  %v216 = vadd.f32 %v55, %v215
  %v217 = vpop.f32.mrf.mxu0
  %218 = vmatprep.mubr.bf16.mxu0 0
  %219 = vmatmul.mubr.bf16.gmra.mxu0 %v101
  %v220 = vpop.f32.mrf.mxu0
  %v221 = vadd.f32 %v56, %v220
  %v222 = vpop.f32.mrf.mxu0
  %v223 = vpop.f32.mrf.mxu0
  %v224 = vadd.f32 %v57, %v223
  %v225 = vpop.f32.mrf.mxu0
  %226 = vmatprep.mubr.bf16.mxu0 0
  %227 = vmatmul.mubr.bf16.gmra.mxu0 %v102
  %v228 = vpop.f32.mrf.mxu0
  %v229 = vadd.f32 %v58, %v228
  %v230 = vpop.f32.mrf.mxu0
  %v231 = vpop.f32.mrf.mxu0
  %v232 = vadd.f32 %v59, %v231
  %v233 = vpop.f32.mrf.mxu0
  %234 = vmatprep.mubr.bf16.mxu0 0
  %235 = vmatmul.mubr.bf16.gmra.mxu0 %v103
  %v236 = vpop.f32.mrf.mxu0
  %v237 = vadd.f32 %v60, %v236
  %v238 = vpop.f32.mrf.mxu0
  %v239 = vpop.f32.mrf.mxu0
  %v240 = vadd.f32 %v61, %v239
  %v241 = vpop.f32.mrf.mxu0
  %242 = vmatprep.mubr.bf16.mxu0 0
  %243 = vmatmul.mubr.bf16.gmra.mxu0 %v104
  %v244 = vpop.f32.mrf.mxu0
  %v245 = vadd.f32 %v62, %v244
  %v246 = vpop.f32.mrf.mxu0
  %v247 = vpop.f32.mrf.mxu0
  %v248 = vadd.f32 %v63, %v247
  %v249 = vpop.f32.mrf.mxu0
  %250 = vmatprep.mubr.bf16.mxu0 0
  %251 = vmatmul.mubr.bf16.gmra.mxu0 %v105
  %v252 = vpop.f32.mrf.mxu0
  %v253 = vadd.f32 %v64, %v252
  %v254 = vpop.f32.mrf.mxu0
  %v255 = vpop.f32.mrf.mxu0
  %v256 = vadd.f32 %v65, %v255
  %v257 = vpop.f32.mrf.mxu0
  %258 = vdwg.mxu0
  %v259 = vmax.f32 %v197, 0.0
  %v260 = vmax.f32 %v200, 0.0
  %v261 = vmax.f32 %v205, 0.0
  %v262 = vmax.f32 %v208, 0.0
  %v263 = vmax.f32 %v213, 0.0
  %v264 = vmax.f32 %v216, 0.0
  %v265 = vmax.f32 %v221, 0.0
  %v266 = vmax.f32 %v224, 0.0
  %v267 = vmax.f32 %v229, 0.0
  %v268 = vmax.f32 %v232, 0.0
  %v269 = vmax.f32 %v237, 0.0
  %v270 = vmax.f32 %v240, 0.0
  %v271 = vmax.f32 %v245, 0.0
  %v272 = vmax.f32 %v248, 0.0
  %v273 = vmax.f32 %v253, 0.0
  %v274 = vmax.f32 %v256, 0.0
  %v275 = vld [vmem:[%s3] sm:$0x1]
  %v277 = vlaneseq
  %v278 = vshrl.u32 %v277, 7
  %v279 = vsub.s32 0, %v278
  %v280 = vrot.slane %v275, %v279
  %v282 = vadd.f32 %v259, %v280
  %v283 = vadd.f32 %v260, %v280
  %v284 = vadd.f32 %v261, %v280
  %v285 = vadd.f32 %v262, %v280
  %v286 = vadd.f32 %v263, %v280
  %v287 = vadd.f32 %v264, %v280
  %v288 = vadd.f32 %v265, %v280
  %v289 = vadd.f32 %v266, %v280
  %v290 = vadd.f32 %v267, %v280
  %v291 = vadd.f32 %v268, %v280
  %v292 = vadd.f32 %v269, %v280
  %v293 = vadd.f32 %v270, %v280
  %v294 = vadd.f32 %v271, %v280
  %v295 = vadd.f32 %v272, %v280
  %v296 = vadd.f32 %v273, %v280
  %v297 = vadd.f32 %v274, %v280
  %298 = vmax.xlane.f32.xlu0 %v282
  %v299 = vpop.xlane.xlu0 %298
  %300 = vmax.xlane.f32.xlu0 %v283
  %v301 = vpop.xlane.xlu0 %300
  %302 = vmax.xlane.f32.xlu0 %v284
  %v303 = vpop.xlane.xlu0 %302
  %304 = vmax.xlane.f32.xlu0 %v285
  %v305 = vpop.xlane.xlu0 %304
  %306 = vmax.xlane.f32.xlu0 %v286
  %v307 = vpop.xlane.xlu0 %306
  %308 = vmax.xlane.f32.xlu0 %v287
  %v309 = vpop.xlane.xlu0 %308
  %310 = vmax.xlane.f32.xlu0 %v288
  %v311 = vpop.xlane.xlu0 %310
  %312 = vmax.xlane.f32.xlu0 %v289
  %v313 = vpop.xlane.xlu0 %312
  %314 = vmax.xlane.f32.xlu0 %v290
  %v315 = vpop.xlane.xlu0 %314
  %316 = vmax.xlane.f32.xlu0 %v291
  %v317 = vpop.xlane.xlu0 %316
  %318 = vmax.xlane.f32.xlu0 %v292
  %v319 = vpop.xlane.xlu0 %318
  %320 = vmax.xlane.f32.xlu0 %v293
  %v321 = vpop.xlane.xlu0 %320
  %322 = vmax.xlane.f32.xlu0 %v294
  %v323 = vpop.xlane.xlu0 %322
  %324 = vmax.xlane.f32.xlu0 %v295
  %v325 = vpop.xlane.xlu0 %324
  %326 = vmax.xlane.f32.xlu0 %v296
  %v327 = vpop.xlane.xlu0 %326
  %328 = vmax.xlane.f32.xlu0 %v297
  %v329 = vpop.xlane.xlu0 %328
  %v330 = vsub.f32 %v282, %v299
  %v331 = vsub.f32 %v283, %v301
  %v332 = vsub.f32 %v284, %v303
  %v333 = vsub.f32 %v285, %v305
  %v334 = vsub.f32 %v286, %v307
  %v335 = vsub.f32 %v287, %v309
  %v336 = vsub.f32 %v288, %v311
  %v337 = vsub.f32 %v289, %v313
  %v338 = vsub.f32 %v290, %v315
  %v339 = vsub.f32 %v291, %v317
  %v340 = vsub.f32 %v292, %v319
  %v341 = vsub.f32 %v293, %v321
  %v342 = vsub.f32 %v294, %v323
  %v343 = vsub.f32 %v295, %v325
  %v344 = vsub.f32 %v296, %v327
  %v345 = vsub.f32 %v297, %v329
  %v346 = vmul.f32 %v330, 1.442695
  %v347 = vpow.pop %v346
  %v348 = vmul.f32 %v331, 1.442695
  %v349 = vpow.pop %v348
  %v350 = vmul.f32 %v332, 1.442695
  %v351 = vpow.pop %v350
  %v352 = vmul.f32 %v333, 1.442695
  %v353 = vpow.pop %v352
  %v354 = vmul.f32 %v334, 1.442695
  %v355 = vpow.pop %v354
  %v356 = vmul.f32 %v335, 1.442695
  %v357 = vpow.pop %v356
  %v358 = vmul.f32 %v336, 1.442695
  %v359 = vpow.pop %v358
  %v360 = vmul.f32 %v337, 1.442695
  %v361 = vpow.pop %v360
  %v362 = vmul.f32 %v338, 1.442695
  %v363 = vpow.pop %v362
  %v364 = vmul.f32 %v339, 1.442695
  %v365 = vpow.pop %v364
  %v366 = vmul.f32 %v340, 1.442695
  %v367 = vpow.pop %v366
  %v368 = vmul.f32 %v341, 1.442695
  %v369 = vpow.pop %v368
  %v370 = vmul.f32 %v342, 1.442695
  %v371 = vpow.pop %v370
  %v372 = vmul.f32 %v343, 1.442695
  %v373 = vpow.pop %v372
  %v374 = vmul.f32 %v344, 1.442695
  %v375 = vpow.pop %v374
  %v376 = vmul.f32 %v345, 1.442695
  %v377 = vpow.pop %v376
  %378 = vadd.xlane.f32.xlu0 %v347
  %v379 = vpop.xlane.xlu0 %378
  %380 = vadd.xlane.f32.xlu0 %v349
  %v381 = vpop.xlane.xlu0 %380
  %382 = vadd.xlane.f32.xlu0 %v351
  %v383 = vpop.xlane.xlu0 %382
  %384 = vadd.xlane.f32.xlu0 %v353
  %v385 = vpop.xlane.xlu0 %384
  %386 = vadd.xlane.f32.xlu0 %v355
  %v387 = vpop.xlane.xlu0 %386
  %388 = vadd.xlane.f32.xlu0 %v357
  %v389 = vpop.xlane.xlu0 %388
  %390 = vadd.xlane.f32.xlu0 %v359
  %v391 = vpop.xlane.xlu0 %390
  %392 = vadd.xlane.f32.xlu0 %v361
  %v393 = vpop.xlane.xlu0 %392
  %394 = vadd.xlane.f32.xlu0 %v363
  %v395 = vpop.xlane.xlu0 %394
  %396 = vadd.xlane.f32.xlu0 %v365
  %v397 = vpop.xlane.xlu0 %396
  %398 = vadd.xlane.f32.xlu0 %v367
  %v399 = vpop.xlane.xlu0 %398
  %400 = vadd.xlane.f32.xlu0 %v369
  %v401 = vpop.xlane.xlu0 %400
  %402 = vadd.xlane.f32.xlu0 %v371
  %v403 = vpop.xlane.xlu0 %402
  %404 = vadd.xlane.f32.xlu0 %v373
  %v405 = vpop.xlane.xlu0 %404
  %406 = vadd.xlane.f32.xlu0 %v375
  %v407 = vpop.xlane.xlu0 %406
  %408 = vadd.xlane.f32.xlu0 %v377
  %v409 = vpop.xlane.xlu0 %408
  %v410 = vrcp.pop %v379
  %v411 = vmul.f32 %v347, %v410
  %v412 = vrcp.pop %v381
  %v413 = vmul.f32 %v349, %v412
  %v414 = vrcp.pop %v383
  %v415 = vmul.f32 %v351, %v414
  %v416 = vrcp.pop %v385
  %v417 = vmul.f32 %v353, %v416
  %v418 = vrcp.pop %v387
  %v419 = vmul.f32 %v355, %v418
  %v420 = vrcp.pop %v389
  %v421 = vmul.f32 %v357, %v420
  %v422 = vrcp.pop %v391
  %v423 = vmul.f32 %v359, %v422
  %v424 = vrcp.pop %v393
  %v425 = vmul.f32 %v361, %v424
  %v426 = vrcp.pop %v395
  %v427 = vmul.f32 %v363, %v426
  %v428 = vrcp.pop %v397
  %v429 = vmul.f32 %v365, %v428
  %v430 = vrcp.pop %v399
  %v431 = vmul.f32 %v367, %v430
  %v432 = vrcp.pop %v401
  %v433 = vmul.f32 %v369, %v432
  %v434 = vrcp.pop %v403
  %v435 = vmul.f32 %v371, %v434
  %v436 = vrcp.pop %v405
  %v437 = vmul.f32 %v373, %v436
  %v438 = vrcp.pop %v407
  %v439 = vmul.f32 %v375, %v438
  %v440 = vrcp.pop %v409
  %v441 = vmul.f32 %v377, %v440
  %442 = vst [vmem:[%s4] sm:$0xff] %v411
  %443 = vst [vmem:[%s4 + $0x8] sm:$0xff] %v413
  %444 = vst [vmem:[%s4 + $0x10] sm:$0xff] %v415
  %445 = vst [vmem:[%s4 + $0x18] sm:$0xff] %v417
  %446 = vst [vmem:[%s4 + $0x20] sm:$0xff] %v419
  %447 = vst [vmem:[%s4 + $0x28] sm:$0xff] %v421
  %448 = vst [vmem:[%s4 + $0x30] sm:$0xff] %v423
  %449 = vst [vmem:[%s4 + $0x38] sm:$0xff] %v425
  %450 = vst [vmem:[%s4 + $0x40] sm:$0xff] %v427
  %451 = vst [vmem:[%s4 + $0x48] sm:$0xff] %v429
  %452 = vst [vmem:[%s4 + $0x50] sm:$0xff] %v431
  %453 = vst [vmem:[%s4 + $0x58] sm:$0xff] %v433
  %454 = vst [vmem:[%s4 + $0x60] sm:$0xff] %v435
  %455 = vst [vmem:[%s4 + $0x68] sm:$0xff] %v437
  %456 = vst [vmem:[%s4 + $0x70] sm:$0xff] %v439
  %457 = vst [vmem:[%s4 + $0x78] sm:$0xff] %v441
  // Predicated region
  $region18: #{arma_forward.5} parent=0 // pred_check
    _
  $region19: #{arma_forward.5} parent=0 // pred_check_branch
    %459 = sbr.rel (0) target = $region21
  $region20: #{arma_forward.5} parent=0 // pred_region
    _
  $region21: #{arma_forward.5} parent=0 // pred_fallthru
    _
  // Predicated region
  $region22: #{arma_forward.5} parent=0 // pred_check
    _
  $region23: #{arma_forward.5} parent=0 // pred_check_branch
    %461 = sbr.rel (0) target = $region25
  $region24: #{arma_forward.5} parent=0 // pred_region
    _
  $region25: #{arma_forward.5} parent=0 // pred_fallthru
    _

// kernel: arma_forward.3
$region0: #{arma_forward.3}
  #allocation0 [shape = 'u32[]', space=smem, size = 0x4, offset = 0x4, fixed_abs, tag = 'smem constant byte address 0x4 - core index']
  #allocation1 [shape = 'u32[144,128]{1,0:T(1,128)}', space=vmem, size = 0x12000, scoped, tag = 'internal scratch']
  %s0 = inlined_call_operand.vmem [shape: bf16[128,16], index: 0, kind: input, shape index: {}]
  %s1 = inlined_call_operand.vmem [shape: bf16[16,256], index: 1, kind: input, shape index: {}]
  %s2 = inlined_call_operand.vmem [shape: f32[1,128], index: 2, kind: input, shape index: {}]
  %s3 = inlined_call_operand.vmem [shape: bf16[128,128], index: 3, kind: output, shape index: {0}]
  %s4 = inlined_call_operand.vmem [shape: f32[128,128], index: 4, kind: output, shape index: {1}]
  %5 = xla_tuple %s3, %s4
  %s6 = sld [smem:[#allocation0]]
  $region30: #{arma_forward.3} parent=0
    _
  %s8 = ssub.s32 1, %s6
  %s9 = scalar_select 0, %s8, %s6
  // Predicated region
  $region2: #{arma_forward.3} parent=0 // pred_check
    _
  $region3: #{arma_forward.3} parent=0 // pred_check_branch
    %11 = sbr.rel (0) target = $region5
  $region4: #{arma_forward.3} parent=0 // pred_region
    _
  $region5: #{arma_forward.3} parent=0 // pred_fallthru
    _
  // Predicated region
  $region6: #{arma_forward.3} parent=0 // pred_check
    _
  $region7: #{arma_forward.3} parent=0 // pred_check_branch
    %13 = sbr.rel (0) target = $region9
  $region8: #{arma_forward.3} parent=0 // pred_region
    _
  $region9: #{arma_forward.3} parent=0 // pred_fallthru
    _
  // Predicated region
  $region10: #{arma_forward.3} parent=0 // pred_check
    _
  $region11: #{arma_forward.3} parent=0 // pred_check_branch
    %15 = sbr.rel (0) target = $region13
  $region12: #{arma_forward.3} parent=0 // pred_region
    _
  $region13: #{arma_forward.3} parent=0 // pred_fallthru
    _
  %v17 = vld [vmem:[%s0] sm:$0xf]
  %v18 = vld [vmem:[%s0 + $0x4] sm:$0xf]
  %v19 = vld [vmem:[%s0 + $0x8] sm:$0xf]
  %v20 = vld [vmem:[%s0 + $0xc] sm:$0xf]
  %v21 = vld [vmem:[%s0 + $0x10] sm:$0xf]
  %v22 = vld [vmem:[%s0 + $0x14] sm:$0xf]
  %v23 = vld [vmem:[%s0 + $0x18] sm:$0xf]
  %v24 = vld [vmem:[%s0 + $0x1c] sm:$0xf]
  %v25 = vld [vmem:[%s0 + $0x20] sm:$0xf]
  %v26 = vld [vmem:[%s0 + $0x24] sm:$0xf]
  %v27 = vld [vmem:[%s0 + $0x28] sm:$0xf]
  %v28 = vld [vmem:[%s0 + $0x2c] sm:$0xf]
  %v29 = vld [vmem:[%s0 + $0x30] sm:$0xf]
  %v30 = vld [vmem:[%s0 + $0x34] sm:$0xf]
  %v31 = vld [vmem:[%s0 + $0x38] sm:$0xf]
  %v32 = vld [vmem:[%s0 + $0x3c] sm:$0xf]
  %v33 = vld [vmem:[%s1] sm:$0xff]
  %v34 = vld [vmem:[%s1 + $0x8] sm:$0xff]
  %v51 = vunpack.c.l.b16 %v17
  %v52 = vunpack.c.l.b16 %v18
  %v53 = vunpack.c.l.b16 %v19
  %v54 = vunpack.c.l.b16 %v20
  %v55 = vunpack.c.l.b16 %v21
  %v56 = vunpack.c.l.b16 %v22
  %v57 = vunpack.c.l.b16 %v23
  %v58 = vunpack.c.l.b16 %v24
  %v59 = vunpack.c.l.b16 %v25
  %v60 = vunpack.c.l.b16 %v26
  %v61 = vunpack.c.l.b16 %v27
  %v62 = vunpack.c.l.b16 %v28
  %v63 = vunpack.c.l.b16 %v29
  %v64 = vunpack.c.l.b16 %v30
  %v65 = vunpack.c.l.b16 %v31
  %v66 = vunpack.c.l.b16 %v32
  %v67 = vpack.c.b16 %v52, %v51
  %v68 = vpack.c.b16 %v54, %v53
  %v69 = vpack.c.b16 %v56, %v55
  %v70 = vpack.c.b16 %v58, %v57
  %v71 = vpack.c.b16 %v60, %v59
  %v72 = vpack.c.b16 %v62, %v61
  %v73 = vpack.c.b16 %v64, %v63
  %v74 = vpack.c.b16 %v66, %v65
  %v77 = vunpack.c.l.b16 %v33
  %v78 = vunpack.c.h.b16 %v33
  %v79 = vunpack.c.l.b16 %v34
  %v80 = vunpack.c.h.b16 %v34
  %v81 = vpack.c.b16 %v79, %v77
  %v82 = vpack.c.b16 %v80, %v78
  %vm85 = vcmask 130048
  %v87 = vsel %vm85, %v67, 0
  %v90 = vsel %vm85, %v68, 0
  %v93 = vsel %vm85, %v69, 0
  %v96 = vsel %vm85, %v70, 0
  %v99 = vsel %vm85, %v71, 0
  %v102 = vsel %vm85, %v72, 0
  %v105 = vsel %vm85, %v73, 0
  %v108 = vsel %vm85, %v74, 0
  %110 = vmatprep.subr.bf16.mxu0 0
  %111 = vmatpush1.bf16.msra.mxu0 0
  %112 = vmatprep.subr.bf16.mxu0 0
  %113 = vmatpush1.bf16.msra.mxu0 0
  %114 = vmatprep.subr.bf16.mxu0 0
  %115 = vmatpush1.bf16.msra.mxu0 0
  %116 = vmatprep.subr.bf16.mxu0 0
  %117 = vmatpush1.bf16.msra.mxu0 0
  %118 = vmatprep.subr.bf16.mxu0 0
  %119 = vmatpush1.bf16.msra.mxu0 0
  %120 = vmatprep.subr.bf16.mxu0 0
  %121 = vmatpush1.bf16.msra.mxu0 0
  %122 = vmatprep.subr.bf16.mxu0 0
  %123 = vmatpush1.bf16.msra.mxu0 0
  %124 = vmatprep.subr.bf16.mxu0 %v82
  %125 = vmatpush1.bf16.msra.mxu0 %v81
  %126 = vmatprep.subr.bf16.mxu0 0
  %127 = vmatpush2.bf16.msra.mxu0 0
  %128 = vmatprep.subr.bf16.mxu0 0
  %129 = vmatpush2.bf16.msra.mxu0 0
  %130 = vmatprep.subr.bf16.mxu0 0
  %131 = vmatpush2.bf16.msra.mxu0 0
  %132 = vmatprep.subr.bf16.mxu0 0
  %133 = vmatpush2.bf16.msra.mxu0 0
  %134 = vmatprep.subr.bf16.mxu0 0
  %135 = vmatpush2.bf16.msra.mxu0 0
  %136 = vmatprep.subr.bf16.mxu0 0
  %137 = vmatpush2.bf16.msra.mxu0 0
  %138 = vmatprep.subr.bf16.mxu0 0
  %139 = vmatpush2.bf16.msra.mxu0 0
  %140 = vmatprep.subr.bf16.mxu0 0
  %141 = vmatpush2.bf16.msra.mxu0 0
  %142 = vmatprep.mubr.bf16.mxu0 0
  %143 = vmatmul.mubr.bf16.gmra.mxu0 %v87
  %v144 = vpop.f32.mrf.mxu0
  %v145 = vadd.f32 0.0, %v144
  %v146 = vpop.f32.mrf.mxu0
  %v147 = vadd.f32 0.0, %v146
  %v148 = vpop.f32.mrf.mxu0
  %v149 = vadd.f32 0.0, %v148
  %v150 = vpop.f32.mrf.mxu0
  %v151 = vadd.f32 0.0, %v150
  %152 = vmatprep.mubr.bf16.mxu0 0
  %153 = vmatmul.mubr.bf16.gmra.mxu0 %v90
  %v154 = vpop.f32.mrf.mxu0
  %v155 = vadd.f32 0.0, %v154
  %v156 = vpop.f32.mrf.mxu0
  %v157 = vadd.f32 0.0, %v156
  %v158 = vpop.f32.mrf.mxu0
  %v159 = vadd.f32 0.0, %v158
  %v160 = vpop.f32.mrf.mxu0
  %v161 = vadd.f32 0.0, %v160
  %162 = vmatprep.mubr.bf16.mxu0 0
  %163 = vmatmul.mubr.bf16.gmra.mxu0 %v93
  %v164 = vpop.f32.mrf.mxu0
  %v165 = vadd.f32 0.0, %v164
  %v166 = vpop.f32.mrf.mxu0
  %v167 = vadd.f32 0.0, %v166
  %v168 = vpop.f32.mrf.mxu0
  %v169 = vadd.f32 0.0, %v168
  %v170 = vpop.f32.mrf.mxu0
  %v171 = vadd.f32 0.0, %v170
  %172 = vmatprep.mubr.bf16.mxu0 0
  %173 = vmatmul.mubr.bf16.gmra.mxu0 %v96
  %v174 = vpop.f32.mrf.mxu0
  %v175 = vadd.f32 0.0, %v174
  %v176 = vpop.f32.mrf.mxu0
  %v177 = vadd.f32 0.0, %v176
  %v178 = vpop.f32.mrf.mxu0
  %v179 = vadd.f32 0.0, %v178
  %v180 = vpop.f32.mrf.mxu0
  %v181 = vadd.f32 0.0, %v180
  %182 = vmatprep.mubr.bf16.mxu0 0
  %183 = vmatmul.mubr.bf16.gmra.mxu0 %v99
  %v184 = vpop.f32.mrf.mxu0
  %v185 = vadd.f32 0.0, %v184
  %v186 = vpop.f32.mrf.mxu0
  %v187 = vadd.f32 0.0, %v186
  %v188 = vpop.f32.mrf.mxu0
  %v189 = vadd.f32 0.0, %v188
  %v190 = vpop.f32.mrf.mxu0
  %v191 = vadd.f32 0.0, %v190
  %192 = vmatprep.mubr.bf16.mxu0 0
  %193 = vmatmul.mubr.bf16.gmra.mxu0 %v102
  %v194 = vpop.f32.mrf.mxu0
  %v195 = vadd.f32 0.0, %v194
  %v196 = vpop.f32.mrf.mxu0
  %v197 = vadd.f32 0.0, %v196
  %v198 = vpop.f32.mrf.mxu0
  %v199 = vadd.f32 0.0, %v198
  %v200 = vpop.f32.mrf.mxu0
  %v201 = vadd.f32 0.0, %v200
  %202 = vmatprep.mubr.bf16.mxu0 0
  %203 = vmatmul.mubr.bf16.gmra.mxu0 %v105
  %v204 = vpop.f32.mrf.mxu0
  %v205 = vadd.f32 0.0, %v204
  %v206 = vpop.f32.mrf.mxu0
  %v207 = vadd.f32 0.0, %v206
  %v208 = vpop.f32.mrf.mxu0
  %v209 = vadd.f32 0.0, %v208
  %v210 = vpop.f32.mrf.mxu0
  %v211 = vadd.f32 0.0, %v210
  %212 = vmatprep.mubr.bf16.mxu0 0
  %213 = vmatmul.mubr.bf16.gmra.mxu0 %v108
  %v214 = vpop.f32.mrf.mxu0
  %v215 = vadd.f32 0.0, %v214
  %v216 = vpop.f32.mrf.mxu0
  %v217 = vadd.f32 0.0, %v216
  %v218 = vpop.f32.mrf.mxu0
  %v219 = vadd.f32 0.0, %v218
  %v220 = vpop.f32.mrf.mxu0
  %v221 = vadd.f32 0.0, %v220
  %222 = vdwg.mxu0
  %v223 = vpack.c.bf16 %v149, %v145
  %v224 = vpack.c.bf16 %v159, %v155
  %v225 = vpack.c.bf16 %v169, %v165
  %v226 = vpack.c.bf16 %v179, %v175
  %v227 = vpack.c.bf16 %v189, %v185
  %v228 = vpack.c.bf16 %v199, %v195
  %v229 = vpack.c.bf16 %v209, %v205
  %v230 = vpack.c.bf16 %v219, %v215
  %v239 = vunpack.c.l.b16 %v223
  %v240 = vunpack.c.h.b16 %v223
  %v241 = vunpack.c.l.b16 %v224
  %v242 = vunpack.c.h.b16 %v224
  %v243 = vunpack.c.l.b16 %v225
  %v244 = vunpack.c.h.b16 %v225
  %v245 = vunpack.c.l.b16 %v226
  %v246 = vunpack.c.h.b16 %v226
  %v247 = vunpack.c.l.b16 %v227
  %v248 = vunpack.c.h.b16 %v227
  %v249 = vunpack.c.l.b16 %v228
  %v250 = vunpack.c.h.b16 %v228
  %v251 = vunpack.c.l.b16 %v229
  %v252 = vunpack.c.h.b16 %v229
  %v253 = vunpack.c.l.b16 %v230
  %v254 = vunpack.c.h.b16 %v230
  %v255 = vpack.c.b16 %v239, %v239
  %v256 = vpack.c.b16 %v240, %v240
  %v257 = vpack.c.b16 %v241, %v241
  %v258 = vpack.c.b16 %v242, %v242
  %v259 = vpack.c.b16 %v243, %v243
  %v260 = vpack.c.b16 %v244, %v244
  %v261 = vpack.c.b16 %v245, %v245
  %v262 = vpack.c.b16 %v246, %v246
  %v263 = vpack.c.b16 %v247, %v247
  %v264 = vpack.c.b16 %v248, %v248
  %v265 = vpack.c.b16 %v249, %v249
  %v266 = vpack.c.b16 %v250, %v250
  %v267 = vpack.c.b16 %v251, %v251
  %v268 = vpack.c.b16 %v252, %v252
  %v269 = vpack.c.b16 %v253, %v253
  %v270 = vpack.c.b16 %v254, %v254
  %287 = vst [vmem:[%s3] sm:$0xf] %v255
  %288 = vst [vmem:[%s3 + $0x4] sm:$0xf] %v256
  %289 = vst [vmem:[%s3 + $0x8] sm:$0xf] %v257
  %290 = vst [vmem:[%s3 + $0xc] sm:$0xf] %v258
  %291 = vst [vmem:[%s3 + $0x10] sm:$0xf] %v259
  %292 = vst [vmem:[%s3 + $0x14] sm:$0xf] %v260
  %293 = vst [vmem:[%s3 + $0x18] sm:$0xf] %v261
  %294 = vst [vmem:[%s3 + $0x1c] sm:$0xf] %v262
  %295 = vst [vmem:[%s3 + $0x20] sm:$0xf] %v263
  %296 = vst [vmem:[%s3 + $0x24] sm:$0xf] %v264
  %297 = vst [vmem:[%s3 + $0x28] sm:$0xf] %v265
  %298 = vst [vmem:[%s3 + $0x2c] sm:$0xf] %v266
  %299 = vst [vmem:[%s3 + $0x30] sm:$0xf] %v267
  %300 = vst [vmem:[%s3 + $0x34] sm:$0xf] %v268
  %301 = vst [vmem:[%s3 + $0x38] sm:$0xf] %v269
  %302 = vst [vmem:[%s3 + $0x3c] sm:$0xf] %v270
  %v303 = vld [vmem:[%s2] sm:$0x1]
  %v305 = vlaneseq
  %v306 = vshrl.u32 %v305, 7
  %v307 = vsub.s32 0, %v306
  %v308 = vrot.slane %v303, %v307
  %v310 = vadd.f32 %v147, %v308
  %v311 = vadd.f32 %v151, %v308
  %v312 = vadd.f32 %v157, %v308
  %v313 = vadd.f32 %v161, %v308
  %v314 = vadd.f32 %v167, %v308
  %v315 = vadd.f32 %v171, %v308
  %v316 = vadd.f32 %v177, %v308
  %v317 = vadd.f32 %v181, %v308
  %v318 = vadd.f32 %v187, %v308
  %v319 = vadd.f32 %v191, %v308
  %v320 = vadd.f32 %v197, %v308
  %v321 = vadd.f32 %v201, %v308
  %v322 = vadd.f32 %v207, %v308
  %v323 = vadd.f32 %v211, %v308
  %v324 = vadd.f32 %v217, %v308
  %v325 = vadd.f32 %v221, %v308
  %326 = vst [vmem:[%s4] sm:$0xff] %v310
  %327 = vst [vmem:[%s4 + $0x8] sm:$0xff] %v311
  %328 = vst [vmem:[%s4 + $0x10] sm:$0xff] %v312
  %329 = vst [vmem:[%s4 + $0x18] sm:$0xff] %v313
  %330 = vst [vmem:[%s4 + $0x20] sm:$0xff] %v314
  %331 = vst [vmem:[%s4 + $0x28] sm:$0xff] %v315
  %332 = vst [vmem:[%s4 + $0x30] sm:$0xff] %v316
  %333 = vst [vmem:[%s4 + $0x38] sm:$0xff] %v317
  %334 = vst [vmem:[%s4 + $0x40] sm:$0xff] %v318
  %335 = vst [vmem:[%s4 + $0x48] sm:$0xff] %v319
  %336 = vst [vmem:[%s4 + $0x50] sm:$0xff] %v320
  %337 = vst [vmem:[%s4 + $0x58] sm:$0xff] %v321
  %338 = vst [vmem:[%s4 + $0x60] sm:$0xff] %v322
  %339 = vst [vmem:[%s4 + $0x68] sm:$0xff] %v323
  %340 = vst [vmem:[%s4 + $0x70] sm:$0xff] %v324
  %341 = vst [vmem:[%s4 + $0x78] sm:$0xff] %v325
  // Predicated region
  $region14: #{arma_forward.3} parent=0 // pred_check
    _
  $region15: #{arma_forward.3} parent=0 // pred_check_branch
    %343 = sbr.rel (0) target = $region17
  $region16: #{arma_forward.3} parent=0 // pred_region
    _
  $region17: #{arma_forward.3} parent=0 // pred_fallthru
    _
  // Predicated region
  $region18: #{arma_forward.3} parent=0 // pred_check
    _
  $region19: #{arma_forward.3} parent=0 // pred_check_branch
    %345 = sbr.rel (0) target = $region21
  $region20: #{arma_forward.3} parent=0 // pred_region
    _
  $region21: #{arma_forward.3} parent=0 // pred_fallthru
    _
  // Predicated region
  $region22: #{arma_forward.3} parent=0 // pred_check
    _
  $region23: #{arma_forward.3} parent=0 // pred_check_branch
    %347 = sbr.rel (0) target = $region25
  $region24: #{arma_forward.3} parent=0 // pred_region
    _
  $region25: #{arma_forward.3} parent=0 // pred_fallthru
    _
  // Predicated region
  $region26: #{arma_forward.3} parent=0 // pred_check
    _
  $region27: #{arma_forward.3} parent=0 // pred_check_branch
    %349 = sbr.rel (0) target = $region29
  $region28: #{arma_forward.3} parent=0 // pred_region
    _
  $region29: #{arma_forward.3} parent=0 // pred_fallthru
    _

// kernel: arma_forward.4
$region0: #{arma_forward.4}
  #allocation0 [shape = 'u32[]', space=smem, size = 0x4, offset = 0x4, fixed_abs, tag = 'smem constant byte address 0x4 - core index']
  #allocation1 [shape = 'u32[144,128]{1,0:T(1,128)}', space=vmem, size = 0x12000, scoped, tag = 'internal scratch']
  %s0 = inlined_call_operand.vmem [shape: bf16[128,128], index: 0, kind: input, shape index: {}]
  %s1 = inlined_call_operand.vmem [shape: bf16[128,128], index: 1, kind: input, shape index: {}]
  %s2 = inlined_call_operand.vmem [shape: f32[128,128], index: 2, kind: input, shape index: {}]
  %s3 = inlined_call_operand.vmem [shape: bf16[128,256], index: 3, kind: input, shape index: {}]
  %s4 = inlined_call_operand.vmem [shape: f32[1,128], index: 4, kind: input, shape index: {}]
  %s5 = inlined_call_operand.vmem [shape: bf16[128,128], index: 5, kind: output, shape index: {0}]
  %s6 = inlined_call_operand.vmem [shape: f32[128,128], index: 6, kind: output, shape index: {1}]
  %7 = xla_tuple %s5, %s6
  %s8 = sld [smem:[#allocation0]]
  $region38: #{arma_forward.4} parent=0
    _
  %s10 = ssub.s32 1, %s8
  %s11 = scalar_select 0, %s10, %s8
  // Predicated region
  $region2: #{arma_forward.4} parent=0 // pred_check
    _
  $region3: #{arma_forward.4} parent=0 // pred_check_branch
    %13 = sbr.rel (0) target = $region5
  $region4: #{arma_forward.4} parent=0 // pred_region
    _
  $region5: #{arma_forward.4} parent=0 // pred_fallthru
    _
  // Predicated region
  $region6: #{arma_forward.4} parent=0 // pred_check
    _
  $region7: #{arma_forward.4} parent=0 // pred_check_branch
    %15 = sbr.rel (0) target = $region9
  $region8: #{arma_forward.4} parent=0 // pred_region
    _
  $region9: #{arma_forward.4} parent=0 // pred_fallthru
    _
  // Predicated region
  $region10: #{arma_forward.4} parent=0 // pred_check
    _
  $region11: #{arma_forward.4} parent=0 // pred_check_branch
    %17 = sbr.rel (0) target = $region13
  $region12: #{arma_forward.4} parent=0 // pred_region
    _
  $region13: #{arma_forward.4} parent=0 // pred_fallthru
    _
  // Predicated region
  $region14: #{arma_forward.4} parent=0 // pred_check
    _
  $region15: #{arma_forward.4} parent=0 // pred_check_branch
    %19 = sbr.rel (0) target = $region17
  $region16: #{arma_forward.4} parent=0 // pred_region
    _
  $region17: #{arma_forward.4} parent=0 // pred_fallthru
    _
  // Predicated region
  $region18: #{arma_forward.4} parent=0 // pred_check
    _
  $region19: #{arma_forward.4} parent=0 // pred_check_branch
    %21 = sbr.rel (0) target = $region21
  $region20: #{arma_forward.4} parent=0 // pred_region
    _
  $region21: #{arma_forward.4} parent=0 // pred_fallthru
    _
  %v23 = vld [vmem:[%s0] sm:$0xf]
  %v24 = vld [vmem:[%s0 + $0x4] sm:$0xf]
  %v25 = vld [vmem:[%s0 + $0x8] sm:$0xf]
  %v26 = vld [vmem:[%s0 + $0xc] sm:$0xf]
  %v27 = vld [vmem:[%s0 + $0x10] sm:$0xf]
  %v28 = vld [vmem:[%s0 + $0x14] sm:$0xf]
  %v29 = vld [vmem:[%s0 + $0x18] sm:$0xf]
  %v30 = vld [vmem:[%s0 + $0x1c] sm:$0xf]
  %v31 = vld [vmem:[%s0 + $0x20] sm:$0xf]
  %v32 = vld [vmem:[%s0 + $0x24] sm:$0xf]
  %v33 = vld [vmem:[%s0 + $0x28] sm:$0xf]
  %v34 = vld [vmem:[%s0 + $0x2c] sm:$0xf]
  %v35 = vld [vmem:[%s0 + $0x30] sm:$0xf]
  %v36 = vld [vmem:[%s0 + $0x34] sm:$0xf]
  %v37 = vld [vmem:[%s0 + $0x38] sm:$0xf]
  %v38 = vld [vmem:[%s0 + $0x3c] sm:$0xf]
  %v39 = vld [vmem:[%s1] sm:$0xf]
  %v40 = vld [vmem:[%s1 + $0x4] sm:$0xf]
  %v41 = vld [vmem:[%s1 + $0x8] sm:$0xf]
  %v42 = vld [vmem:[%s1 + $0xc] sm:$0xf]
  %v43 = vld [vmem:[%s1 + $0x10] sm:$0xf]
  %v44 = vld [vmem:[%s1 + $0x14] sm:$0xf]
  %v45 = vld [vmem:[%s1 + $0x18] sm:$0xf]
  %v46 = vld [vmem:[%s1 + $0x1c] sm:$0xf]
  %v47 = vld [vmem:[%s1 + $0x20] sm:$0xf]
  %v48 = vld [vmem:[%s1 + $0x24] sm:$0xf]
  %v49 = vld [vmem:[%s1 + $0x28] sm:$0xf]
  %v50 = vld [vmem:[%s1 + $0x2c] sm:$0xf]
  %v51 = vld [vmem:[%s1 + $0x30] sm:$0xf]
  %v52 = vld [vmem:[%s1 + $0x34] sm:$0xf]
  %v53 = vld [vmem:[%s1 + $0x38] sm:$0xf]
  %v54 = vld [vmem:[%s1 + $0x3c] sm:$0xf]
  %v55 = vld [vmem:[%s2] sm:$0xff]
  %v56 = vld [vmem:[%s2 + $0x8] sm:$0xff]
  %v57 = vld [vmem:[%s2 + $0x10] sm:$0xff]
  %v58 = vld [vmem:[%s2 + $0x18] sm:$0xff]
  %v59 = vld [vmem:[%s2 + $0x20] sm:$0xff]
  %v60 = vld [vmem:[%s2 + $0x28] sm:$0xff]
  %v61 = vld [vmem:[%s2 + $0x30] sm:$0xff]
  %v62 = vld [vmem:[%s2 + $0x38] sm:$0xff]
  %v63 = vld [vmem:[%s2 + $0x40] sm:$0xff]
  %v64 = vld [vmem:[%s2 + $0x48] sm:$0xff]
  %v65 = vld [vmem:[%s2 + $0x50] sm:$0xff]
  %v66 = vld [vmem:[%s2 + $0x58] sm:$0xff]
  %v67 = vld [vmem:[%s2 + $0x60] sm:$0xff]
  %v68 = vld [vmem:[%s2 + $0x68] sm:$0xff]
  %v69 = vld [vmem:[%s2 + $0x70] sm:$0xff]
  %v70 = vld [vmem:[%s2 + $0x78] sm:$0xff]
  %v87 = vunpack.c.l.b16 %v23
  %v88 = vunpack.c.l.b16 %v24
  %v89 = vunpack.c.l.b16 %v25
  %v90 = vunpack.c.l.b16 %v26
  %v91 = vunpack.c.l.b16 %v27
  %v92 = vunpack.c.l.b16 %v28
  %v93 = vunpack.c.l.b16 %v29
  %v94 = vunpack.c.l.b16 %v30
  %v95 = vunpack.c.l.b16 %v31
  %v96 = vunpack.c.l.b16 %v32
  %v97 = vunpack.c.l.b16 %v33
  %v98 = vunpack.c.l.b16 %v34
  %v99 = vunpack.c.l.b16 %v35
  %v100 = vunpack.c.l.b16 %v36
  %v101 = vunpack.c.l.b16 %v37
  %v102 = vunpack.c.l.b16 %v38
  %v103 = vpack.c.b16 %v88, %v87
  %v104 = vpack.c.b16 %v90, %v89
  %v105 = vpack.c.b16 %v92, %v91
  %v106 = vpack.c.b16 %v94, %v93
  %v107 = vpack.c.b16 %v96, %v95
  %v108 = vpack.c.b16 %v98, %v97
  %v109 = vpack.c.b16 %v100, %v99
  %v110 = vpack.c.b16 %v102, %v101
  %v135 = vunpack.c.l.b16 %v39
  %v136 = vunpack.c.l.b16 %v40
  %v137 = vunpack.c.l.b16 %v41
  %v138 = vunpack.c.l.b16 %v42
  %v139 = vunpack.c.l.b16 %v43
  %v140 = vunpack.c.l.b16 %v44
  %v141 = vunpack.c.l.b16 %v45
  %v142 = vunpack.c.l.b16 %v46
  %v143 = vunpack.c.l.b16 %v47
  %v144 = vunpack.c.l.b16 %v48
  %v145 = vunpack.c.l.b16 %v49
  %v146 = vunpack.c.l.b16 %v50
  %v147 = vunpack.c.l.b16 %v51
  %v148 = vunpack.c.l.b16 %v52
  %v149 = vunpack.c.l.b16 %v53
  %v150 = vunpack.c.l.b16 %v54
  %v151 = vpack.c.b16 %v136, %v135
  %v152 = vpack.c.b16 %v138, %v137
  %v153 = vpack.c.b16 %v140, %v139
  %v154 = vpack.c.b16 %v142, %v141
  %v155 = vpack.c.b16 %v144, %v143
  %v156 = vpack.c.b16 %v146, %v145
  %v157 = vpack.c.b16 %v148, %v147
  %v158 = vpack.c.b16 %v150, %v149
  %167 = vmatprep.subr.bf16.mxu0 0
  %168 = vmatpush1.bf16.msra.mxu0 %v158
  %169 = vmatprep.subr.bf16.mxu0 0
  %170 = vmatpush1.bf16.msra.mxu0 %v157
  %171 = vmatprep.subr.bf16.mxu0 0
  %172 = vmatpush1.bf16.msra.mxu0 %v156
  %173 = vmatprep.subr.bf16.mxu0 0
  %174 = vmatpush1.bf16.msra.mxu0 %v155
  %175 = vmatprep.subr.bf16.mxu0 0
  %176 = vmatpush1.bf16.msra.mxu0 %v154
  %177 = vmatprep.subr.bf16.mxu0 0
  %178 = vmatpush1.bf16.msra.mxu0 %v153
  %179 = vmatprep.subr.bf16.mxu0 0
  %180 = vmatpush1.bf16.msra.mxu0 %v152
  %181 = vmatprep.subr.bf16.mxu0 0
  %182 = vmatpush1.bf16.msra.mxu0 %v151
  %183 = vmatprep.subr.bf16.mxu0 0
  %184 = vmatpush2.bf16.msra.mxu0 0
  %185 = vmatprep.subr.bf16.mxu0 0
  %186 = vmatpush2.bf16.msra.mxu0 0
  %187 = vmatprep.subr.bf16.mxu0 0
  %188 = vmatpush2.bf16.msra.mxu0 0
  %189 = vmatprep.subr.bf16.mxu0 0
  %190 = vmatpush2.bf16.msra.mxu0 0
  %191 = vmatprep.subr.bf16.mxu0 0
  %192 = vmatpush2.bf16.msra.mxu0 0
  %193 = vmatprep.subr.bf16.mxu0 0
  %194 = vmatpush2.bf16.msra.mxu0 0
  %195 = vmatprep.subr.bf16.mxu0 0
  %196 = vmatpush2.bf16.msra.mxu0 0
  %197 = vmatprep.subr.bf16.mxu0 0
  %198 = vmatpush2.bf16.msra.mxu0 0
  %199 = vmatprep.mubr.bf16.mxu0 0
  %200 = vmatmul.mubr.bf16.gmra.mxu0 %v103
  %v201 = vpop.f32.mrf.mxu0
  %v202 = vadd.f32 %v55, %v201
  %v203 = vpop.f32.mrf.mxu0
  %v204 = vpop.f32.mrf.mxu0
  %v205 = vadd.f32 %v56, %v204
  %v206 = vpop.f32.mrf.mxu0
  %207 = vmatprep.mubr.bf16.mxu0 0
  %208 = vmatmul.mubr.bf16.gmra.mxu0 %v104
  %v209 = vpop.f32.mrf.mxu0
  %v210 = vadd.f32 %v57, %v209
  %v211 = vpop.f32.mrf.mxu0
  %v212 = vpop.f32.mrf.mxu0
  %v213 = vadd.f32 %v58, %v212
  %v214 = vpop.f32.mrf.mxu0
  %215 = vmatprep.mubr.bf16.mxu0 0
  %216 = vmatmul.mubr.bf16.gmra.mxu0 %v105
  %v217 = vpop.f32.mrf.mxu0
  %v218 = vadd.f32 %v59, %v217
  %v219 = vpop.f32.mrf.mxu0
  %v220 = vpop.f32.mrf.mxu0
  %v221 = vadd.f32 %v60, %v220
  %v222 = vpop.f32.mrf.mxu0
  %223 = vmatprep.mubr.bf16.mxu0 0
  %224 = vmatmul.mubr.bf16.gmra.mxu0 %v106
  %v225 = vpop.f32.mrf.mxu0
  %v226 = vadd.f32 %v61, %v225
  %v227 = vpop.f32.mrf.mxu0
  %v228 = vpop.f32.mrf.mxu0
  %v229 = vadd.f32 %v62, %v228
  %v230 = vpop.f32.mrf.mxu0
  %231 = vmatprep.mubr.bf16.mxu0 0
  %232 = vmatmul.mubr.bf16.gmra.mxu0 %v107
  %v233 = vpop.f32.mrf.mxu0
  %v234 = vadd.f32 %v63, %v233
  %v235 = vpop.f32.mrf.mxu0
  %v236 = vpop.f32.mrf.mxu0
  %v237 = vadd.f32 %v64, %v236
  %v238 = vpop.f32.mrf.mxu0
  %239 = vmatprep.mubr.bf16.mxu0 0
  %240 = vmatmul.mubr.bf16.gmra.mxu0 %v108
  %v241 = vpop.f32.mrf.mxu0
  %v242 = vadd.f32 %v65, %v241
  %v243 = vpop.f32.mrf.mxu0
  %v244 = vpop.f32.mrf.mxu0
  %v245 = vadd.f32 %v66, %v244
  %v246 = vpop.f32.mrf.mxu0
  %247 = vmatprep.mubr.bf16.mxu0 0
  %248 = vmatmul.mubr.bf16.gmra.mxu0 %v109
  %v249 = vpop.f32.mrf.mxu0
  %v250 = vadd.f32 %v67, %v249
  %v251 = vpop.f32.mrf.mxu0
  %v252 = vpop.f32.mrf.mxu0
  %v253 = vadd.f32 %v68, %v252
  %v254 = vpop.f32.mrf.mxu0
  %255 = vmatprep.mubr.bf16.mxu0 0
  %256 = vmatmul.mubr.bf16.gmra.mxu0 %v110
  %v257 = vpop.f32.mrf.mxu0
  %v258 = vadd.f32 %v69, %v257
  %v259 = vpop.f32.mrf.mxu0
  %v260 = vpop.f32.mrf.mxu0
  %v261 = vadd.f32 %v70, %v260
  %v262 = vpop.f32.mrf.mxu0
  %263 = vdwg.mxu0
  %v264 = vmax.f32 %v202, 0.0
  %v265 = vmax.f32 %v205, 0.0
  %v266 = vmax.f32 %v210, 0.0
  %v267 = vmax.f32 %v213, 0.0
  %v268 = vmax.f32 %v218, 0.0
  %v269 = vmax.f32 %v221, 0.0
  %v270 = vmax.f32 %v226, 0.0
  %v271 = vmax.f32 %v229, 0.0
  %v272 = vmax.f32 %v234, 0.0
  %v273 = vmax.f32 %v237, 0.0
  %v274 = vmax.f32 %v242, 0.0
  %v275 = vmax.f32 %v245, 0.0
  %v276 = vmax.f32 %v250, 0.0
  %v277 = vmax.f32 %v253, 0.0
  %v278 = vmax.f32 %v258, 0.0
  %v279 = vmax.f32 %v261, 0.0
  %v280 = vpack.c.bf16 %v265, %v264
  %v281 = vpack.c.bf16 %v267, %v266
  %v282 = vpack.c.bf16 %v269, %v268
  %v283 = vpack.c.bf16 %v271, %v270
  %v284 = vpack.c.bf16 %v273, %v272
  %v285 = vpack.c.bf16 %v275, %v274
  %v286 = vpack.c.bf16 %v277, %v276
  %v287 = vpack.c.bf16 %v279, %v278
  %v288 = vld [vmem:[%s3] sm:$0xff]
  %v289 = vld [vmem:[%s3 + $0x8] sm:$0xff]
  %v290 = vld [vmem:[%s3 + $0x10] sm:$0xff]
  %v291 = vld [vmem:[%s3 + $0x18] sm:$0xff]
  %v292 = vld [vmem:[%s3 + $0x20] sm:$0xff]
  %v293 = vld [vmem:[%s3 + $0x28] sm:$0xff]
  %v294 = vld [vmem:[%s3 + $0x30] sm:$0xff]
  %v295 = vld [vmem:[%s3 + $0x38] sm:$0xff]
  %v296 = vld [vmem:[%s3 + $0x40] sm:$0xff]
  %v297 = vld [vmem:[%s3 + $0x48] sm:$0xff]
  %v298 = vld [vmem:[%s3 + $0x50] sm:$0xff]
  %v299 = vld [vmem:[%s3 + $0x58] sm:$0xff]
  %v300 = vld [vmem:[%s3 + $0x60] sm:$0xff]
  %v301 = vld [vmem:[%s3 + $0x68] sm:$0xff]
  %v302 = vld [vmem:[%s3 + $0x70] sm:$0xff]
  %v303 = vld [vmem:[%s3 + $0x78] sm:$0xff]
  %v320 = vunpack.c.l.b16 %v288
  %v321 = vunpack.c.h.b16 %v288
  %v322 = vunpack.c.l.b16 %v289
  %v323 = vunpack.c.h.b16 %v289
  %v324 = vunpack.c.l.b16 %v290
  %v325 = vunpack.c.h.b16 %v290
  %v326 = vunpack.c.l.b16 %v291
  %v327 = vunpack.c.h.b16 %v291
  %v328 = vunpack.c.l.b16 %v292
  %v329 = vunpack.c.h.b16 %v292
  %v330 = vunpack.c.l.b16 %v293
  %v331 = vunpack.c.h.b16 %v293
  %v332 = vunpack.c.l.b16 %v294
  %v333 = vunpack.c.h.b16 %v294
  %v334 = vunpack.c.l.b16 %v295
  %v335 = vunpack.c.h.b16 %v295
  %v336 = vunpack.c.l.b16 %v296
  %v337 = vunpack.c.h.b16 %v296
  %v338 = vunpack.c.l.b16 %v297
  %v339 = vunpack.c.h.b16 %v297
  %v340 = vunpack.c.l.b16 %v298
  %v341 = vunpack.c.h.b16 %v298
  %v342 = vunpack.c.l.b16 %v299
  %v343 = vunpack.c.h.b16 %v299
  %v344 = vunpack.c.l.b16 %v300
  %v345 = vunpack.c.h.b16 %v300
  %v346 = vunpack.c.l.b16 %v301
  %v347 = vunpack.c.h.b16 %v301
  %v348 = vunpack.c.l.b16 %v302
  %v349 = vunpack.c.h.b16 %v302
  %v350 = vunpack.c.l.b16 %v303
  %v351 = vunpack.c.h.b16 %v303
  %v352 = vpack.c.b16 %v322, %v320
  %v353 = vpack.c.b16 %v323, %v321
  %v354 = vpack.c.b16 %v326, %v324
  %v355 = vpack.c.b16 %v327, %v325
  %v356 = vpack.c.b16 %v330, %v328
  %v357 = vpack.c.b16 %v331, %v329
  %v358 = vpack.c.b16 %v334, %v332
  %v359 = vpack.c.b16 %v335, %v333
  %v360 = vpack.c.b16 %v338, %v336
  %v361 = vpack.c.b16 %v339, %v337
  %v362 = vpack.c.b16 %v342, %v340
  %v363 = vpack.c.b16 %v343, %v341
  %v364 = vpack.c.b16 %v346, %v344
  %v365 = vpack.c.b16 %v347, %v345
  %v366 = vpack.c.b16 %v350, %v348
  %v367 = vpack.c.b16 %v351, %v349
  %384 = vmatprep.subr.bf16.mxu0 %v367
  %385 = vmatpush1.bf16.msra.mxu0 %v366
  %386 = vmatprep.subr.bf16.mxu0 %v365
  %387 = vmatpush1.bf16.msra.mxu0 %v364
  %388 = vmatprep.subr.bf16.mxu0 %v363
  %389 = vmatpush1.bf16.msra.mxu0 %v362
  %390 = vmatprep.subr.bf16.mxu0 %v361
  %391 = vmatpush1.bf16.msra.mxu0 %v360
  %392 = vmatprep.subr.bf16.mxu0 %v359
  %393 = vmatpush1.bf16.msra.mxu0 %v358
  %394 = vmatprep.subr.bf16.mxu0 %v357
  %395 = vmatpush1.bf16.msra.mxu0 %v356
  %396 = vmatprep.subr.bf16.mxu0 %v355
  %397 = vmatpush1.bf16.msra.mxu0 %v354
  %398 = vmatprep.subr.bf16.mxu0 %v353
  %399 = vmatpush1.bf16.msra.mxu0 %v352
  %400 = vmatprep.subr.bf16.mxu0 0
  %401 = vmatpush2.bf16.msra.mxu0 0
  %402 = vmatprep.subr.bf16.mxu0 0
  %403 = vmatpush2.bf16.msra.mxu0 0
  %404 = vmatprep.subr.bf16.mxu0 0
  %405 = vmatpush2.bf16.msra.mxu0 0
  %406 = vmatprep.subr.bf16.mxu0 0
  %407 = vmatpush2.bf16.msra.mxu0 0
  %408 = vmatprep.subr.bf16.mxu0 0
  %409 = vmatpush2.bf16.msra.mxu0 0
  %410 = vmatprep.subr.bf16.mxu0 0
  %411 = vmatpush2.bf16.msra.mxu0 0
  %412 = vmatprep.subr.bf16.mxu0 0
  %413 = vmatpush2.bf16.msra.mxu0 0
  %414 = vmatprep.subr.bf16.mxu0 0
  %415 = vmatpush2.bf16.msra.mxu0 0
  %416 = vmatprep.mubr.bf16.mxu0 0
  %417 = vmatmul.mubr.bf16.gmra.mxu0 %v280
  %v418 = vpop.f32.mrf.mxu0
  %v419 = vadd.f32 0.0, %v418
  %v420 = vpop.f32.mrf.mxu0
  %v421 = vadd.f32 0.0, %v420
  %v422 = vpop.f32.mrf.mxu0
  %v423 = vadd.f32 0.0, %v422
  %v424 = vpop.f32.mrf.mxu0
  %v425 = vadd.f32 0.0, %v424
  %426 = vmatprep.mubr.bf16.mxu0 0
  %427 = vmatmul.mubr.bf16.gmra.mxu0 %v281
  %v428 = vpop.f32.mrf.mxu0
  %v429 = vadd.f32 0.0, %v428
  %v430 = vpop.f32.mrf.mxu0
  %v431 = vadd.f32 0.0, %v430
  %v432 = vpop.f32.mrf.mxu0
  %v433 = vadd.f32 0.0, %v432
  %v434 = vpop.f32.mrf.mxu0
  %v435 = vadd.f32 0.0, %v434
  %436 = vmatprep.mubr.bf16.mxu0 0
  %437 = vmatmul.mubr.bf16.gmra.mxu0 %v282
  %v438 = vpop.f32.mrf.mxu0
  %v439 = vadd.f32 0.0, %v438
  %v440 = vpop.f32.mrf.mxu0
  %v441 = vadd.f32 0.0, %v440
  %v442 = vpop.f32.mrf.mxu0
  %v443 = vadd.f32 0.0, %v442
  %v444 = vpop.f32.mrf.mxu0
  %v445 = vadd.f32 0.0, %v444
  %446 = vmatprep.mubr.bf16.mxu0 0
  %447 = vmatmul.mubr.bf16.gmra.mxu0 %v283
  %v448 = vpop.f32.mrf.mxu0
  %v449 = vadd.f32 0.0, %v448
  %v450 = vpop.f32.mrf.mxu0
  %v451 = vadd.f32 0.0, %v450
  %v452 = vpop.f32.mrf.mxu0
  %v453 = vadd.f32 0.0, %v452
  %v454 = vpop.f32.mrf.mxu0
  %v455 = vadd.f32 0.0, %v454
  %456 = vmatprep.mubr.bf16.mxu0 0
  %457 = vmatmul.mubr.bf16.gmra.mxu0 %v284
  %v458 = vpop.f32.mrf.mxu0
  %v459 = vadd.f32 0.0, %v458
  %v460 = vpop.f32.mrf.mxu0
  %v461 = vadd.f32 0.0, %v460
  %v462 = vpop.f32.mrf.mxu0
  %v463 = vadd.f32 0.0, %v462
  %v464 = vpop.f32.mrf.mxu0
  %v465 = vadd.f32 0.0, %v464
  %466 = vmatprep.mubr.bf16.mxu0 0
  %467 = vmatmul.mubr.bf16.gmra.mxu0 %v285
  %v468 = vpop.f32.mrf.mxu0
  %v469 = vadd.f32 0.0, %v468
  %v470 = vpop.f32.mrf.mxu0
  %v471 = vadd.f32 0.0, %v470
  %v472 = vpop.f32.mrf.mxu0
  %v473 = vadd.f32 0.0, %v472
  %v474 = vpop.f32.mrf.mxu0
  %v475 = vadd.f32 0.0, %v474
  %476 = vmatprep.mubr.bf16.mxu0 0
  %477 = vmatmul.mubr.bf16.gmra.mxu0 %v286
  %v478 = vpop.f32.mrf.mxu0
  %v479 = vadd.f32 0.0, %v478
  %v480 = vpop.f32.mrf.mxu0
  %v481 = vadd.f32 0.0, %v480
  %v482 = vpop.f32.mrf.mxu0
  %v483 = vadd.f32 0.0, %v482
  %v484 = vpop.f32.mrf.mxu0
  %v485 = vadd.f32 0.0, %v484
  %486 = vmatprep.mubr.bf16.mxu0 0
  %487 = vmatmul.mubr.bf16.gmra.mxu0 %v287
  %v488 = vpop.f32.mrf.mxu0
  %v489 = vadd.f32 0.0, %v488
  %v490 = vpop.f32.mrf.mxu0
  %v491 = vadd.f32 0.0, %v490
  %v492 = vpop.f32.mrf.mxu0
  %v493 = vadd.f32 0.0, %v492
  %v494 = vpop.f32.mrf.mxu0
  %v495 = vadd.f32 0.0, %v494
  %496 = vdwg.mxu0
  %v497 = vpack.c.bf16 %v423, %v419
  %v498 = vpack.c.bf16 %v433, %v429
  %v499 = vpack.c.bf16 %v443, %v439
  %v500 = vpack.c.bf16 %v453, %v449
  %v501 = vpack.c.bf16 %v463, %v459
  %v502 = vpack.c.bf16 %v473, %v469
  %v503 = vpack.c.bf16 %v483, %v479
  %v504 = vpack.c.bf16 %v493, %v489
  %v513 = vunpack.c.l.b16 %v497
  %v514 = vunpack.c.h.b16 %v497
  %v515 = vunpack.c.l.b16 %v498
  %v516 = vunpack.c.h.b16 %v498
  %v517 = vunpack.c.l.b16 %v499
  %v518 = vunpack.c.h.b16 %v499
  %v519 = vunpack.c.l.b16 %v500
  %v520 = vunpack.c.h.b16 %v500
  %v521 = vunpack.c.l.b16 %v501
  %v522 = vunpack.c.h.b16 %v501
  %v523 = vunpack.c.l.b16 %v502
  %v524 = vunpack.c.h.b16 %v502
  %v525 = vunpack.c.l.b16 %v503
  %v526 = vunpack.c.h.b16 %v503
  %v527 = vunpack.c.l.b16 %v504
  %v528 = vunpack.c.h.b16 %v504
  %v529 = vpack.c.b16 %v513, %v513
  %v530 = vpack.c.b16 %v514, %v514
  %v531 = vpack.c.b16 %v515, %v515
  %v532 = vpack.c.b16 %v516, %v516
  %v533 = vpack.c.b16 %v517, %v517
  %v534 = vpack.c.b16 %v518, %v518
  %v535 = vpack.c.b16 %v519, %v519
  %v536 = vpack.c.b16 %v520, %v520
  %v537 = vpack.c.b16 %v521, %v521
  %v538 = vpack.c.b16 %v522, %v522
  %v539 = vpack.c.b16 %v523, %v523
  %v540 = vpack.c.b16 %v524, %v524
  %v541 = vpack.c.b16 %v525, %v525
  %v542 = vpack.c.b16 %v526, %v526
  %v543 = vpack.c.b16 %v527, %v527
  %v544 = vpack.c.b16 %v528, %v528
  %561 = vst [vmem:[%s5] sm:$0xf] %v529
  %562 = vst [vmem:[%s5 + $0x4] sm:$0xf] %v530
  %563 = vst [vmem:[%s5 + $0x8] sm:$0xf] %v531
  %564 = vst [vmem:[%s5 + $0xc] sm:$0xf] %v532
  %565 = vst [vmem:[%s5 + $0x10] sm:$0xf] %v533
  %566 = vst [vmem:[%s5 + $0x14] sm:$0xf] %v534
  %567 = vst [vmem:[%s5 + $0x18] sm:$0xf] %v535
  %568 = vst [vmem:[%s5 + $0x1c] sm:$0xf] %v536
  %569 = vst [vmem:[%s5 + $0x20] sm:$0xf] %v537
  %570 = vst [vmem:[%s5 + $0x24] sm:$0xf] %v538
  %571 = vst [vmem:[%s5 + $0x28] sm:$0xf] %v539
  %572 = vst [vmem:[%s5 + $0x2c] sm:$0xf] %v540
  %573 = vst [vmem:[%s5 + $0x30] sm:$0xf] %v541
  %574 = vst [vmem:[%s5 + $0x34] sm:$0xf] %v542
  %575 = vst [vmem:[%s5 + $0x38] sm:$0xf] %v543
  %576 = vst [vmem:[%s5 + $0x3c] sm:$0xf] %v544
  %v577 = vld [vmem:[%s4] sm:$0x1]
  %v579 = vlaneseq
  %v580 = vshrl.u32 %v579, 7
  %v581 = vsub.s32 0, %v580
  %v582 = vrot.slane %v577, %v581
  %v584 = vadd.f32 %v421, %v582
  %v585 = vadd.f32 %v425, %v582
  %v586 = vadd.f32 %v431, %v582
  %v587 = vadd.f32 %v435, %v582
  %v588 = vadd.f32 %v441, %v582
  %v589 = vadd.f32 %v445, %v582
  %v590 = vadd.f32 %v451, %v582
  %v591 = vadd.f32 %v455, %v582
  %v592 = vadd.f32 %v461, %v582
  %v593 = vadd.f32 %v465, %v582
  %v594 = vadd.f32 %v471, %v582
  %v595 = vadd.f32 %v475, %v582
  %v596 = vadd.f32 %v481, %v582
  %v597 = vadd.f32 %v485, %v582
  %v598 = vadd.f32 %v491, %v582
  %v599 = vadd.f32 %v495, %v582
  %600 = vst [vmem:[%s6] sm:$0xff] %v584
  %601 = vst [vmem:[%s6 + $0x8] sm:$0xff] %v585
  %602 = vst [vmem:[%s6 + $0x10] sm:$0xff] %v586
  %603 = vst [vmem:[%s6 + $0x18] sm:$0xff] %v587
  %604 = vst [vmem:[%s6 + $0x20] sm:$0xff] %v588
  %605 = vst [vmem:[%s6 + $0x28] sm:$0xff] %v589
  %606 = vst [vmem:[%s6 + $0x30] sm:$0xff] %v590
  %607 = vst [vmem:[%s6 + $0x38] sm:$0xff] %v591
  %608 = vst [vmem:[%s6 + $0x40] sm:$0xff] %v592
  %609 = vst [vmem:[%s6 + $0x48] sm:$0xff] %v593
  %610 = vst [vmem:[%s6 + $0x50] sm:$0xff] %v594
  %611 = vst [vmem:[%s6 + $0x58] sm:$0xff] %v595
  %612 = vst [vmem:[%s6 + $0x60] sm:$0xff] %v596
  %613 = vst [vmem:[%s6 + $0x68] sm:$0xff] %v597
  %614 = vst [vmem:[%s6 + $0x70] sm:$0xff] %v598
  %615 = vst [vmem:[%s6 + $0x78] sm:$0xff] %v599
  // Predicated region
  $region22: #{arma_forward.4} parent=0 // pred_check
    _
  $region23: #{arma_forward.4} parent=0 // pred_check_branch
    %617 = sbr.rel (0) target = $region25
  $region24: #{arma_forward.4} parent=0 // pred_region
    _
  $region25: #{arma_forward.4} parent=0 // pred_fallthru
    _
  // Predicated region
  $region26: #{arma_forward.4} parent=0 // pred_check
    _
  $region27: #{arma_forward.4} parent=0 // pred_check_branch
    %619 = sbr.rel (0) target = $region29
  $region28: #{arma_forward.4} parent=0 // pred_region
    _
  $region29: #{arma_forward.4} parent=0 // pred_fallthru
    _
  // Predicated region
  $region30: #{arma_forward.4} parent=0 // pred_check
    _
  $region31: #{arma_forward.4} parent=0 // pred_check_branch
    %621 = sbr.rel (0) target = $region33
  $region32: #{arma_forward.4} parent=0 // pred_region
    _
  $region33: #{arma_forward.4} parent=0 // pred_fallthru
    _
  // Predicated region
  $region34: #{arma_forward.4} parent=0 // pred_check
    _
  $region35: #{arma_forward.4} parent=0 // pred_check_branch
    %623 = sbr.rel (0) target = $region37
  $region36: #{arma_forward.4} parent=0 // pred_region
    _
  $region37: #{arma_forward.4} parent=0 // pred_fallthru
    _

</llo_original>
